<compile_context>
chip_gen: v7x
topology: tpu7x:2x2x1
jax: 0.10.0
libtpu: 0.0.40
codegen_flags: <defaults>
</compile_context>

<pallas_src>
import math
import jax
import jax.numpy as jnp
from jax.experimental import pallas as pl
from jax.experimental.pallas import tpu as pltpu  # noqa: F401  (kept for TPU-specific helpers)

# ---- small synthetic config ----
B = 2              # batch
S = 16             # sequence length
H = 32             # hidden size
V = 64             # vocab size
NH = 4             # attention heads
DH = H // NH       # head dim
FF = 4 * H         # feed-forward width
NF = 8             # num_filters
FILTER_SIZES = (2, 3, 4)
KMAX = max(FILTER_SIZES)
NFILT = len(FILTER_SIZES)
CF = NFILT * NF    # concatenated conv feature width
NL = 4             # num_labels
NL_PAD = 128       # lane-dense padded logits width
BS = B * S         # rows after folding batch into the block
LN_EPS = 1e-12

# rows of the packed (16, 128) vector slab
(_LN0G, _LN0B, _LN1G, _LN1B, _LN2G, _LN2B,
 _BO, _BFF2, _BQKV, _BFF1, _BCONV, _BFC) = range(12)
VROWS = 16
VLANE = 128


def _layernorm(x, g, b):
    mu = jnp.mean(x, axis=-1, keepdims=True)
    var = jnp.mean((x - mu) ** 2, axis=-1, keepdims=True)
    return (x - mu) * jax.lax.rsqrt(var + LN_EPS) * g + b


# ---------------------------------------------------------------------------
# Fused kernel: single block (whole batch).
#   encoder layer -> conv(ReLU) over all filter widths (one matmul) -> max-pool -> FC
# ---------------------------------------------------------------------------
def _fused_kernel(x_ref, amask_ref, vecs_ref, wmat_ref, wff2_ref, conv_ref, fcw_ref,
                  out_ref):
    scale = 1.0 / math.sqrt(DH)
    vec = lambda r, w: vecs_ref[r:r + 1, :w]                   # (1, w) packed vector row

    # ---- synthetic BERT encoder layer (embedding LayerNorm first) ----
    x = _layernorm(x_ref[...], vec(_LN0G, H), vec(_LN0B, H))   # (BS, H)

    # fused QKV projection: one (BS,H) @ (H,3H) matmul
    qkv = (jnp.dot(x, wmat_ref[:, :3 * H], preferred_element_type=jnp.float32)
           + vec(_BQKV, 3 * H))
    q, k, v = qkv[:, :H], qkv[:, H:2 * H], qkv[:, 2 * H:]
    heads = lambda t: jnp.stack([t[:, h * DH:(h + 1) * DH] for h in range(NH)], axis=0)
    qh, kh, vh = heads(q), heads(k), heads(v)                  # (NH, BS, DH)

    # head-batched attention over the flattened (batch*seq) axis; cross-batch and padded
    # keys are removed by the precomputed block-diagonal additive mask.
    s = jnp.einsum("hqd,hkd->hqk", qh, kh,
                   preferred_element_type=jnp.float32) * scale + amask_ref[...]
    s = s - jnp.max(s, axis=-1, keepdims=True)
    e = jnp.exp(s)
    probs = e * pl.reciprocal(jnp.sum(e, axis=-1, keepdims=True), approx=True)
    ctx_h = jnp.einsum("hqk,hkd->hqd", probs, vh, preferred_element_type=jnp.float32)
    ctx = jnp.concatenate([ctx_h[h] for h in range(NH)], axis=1)   # (BS, H)

    attn = (jnp.dot(ctx, wmat_ref[:, 3 * H:4 * H], preferred_element_type=jnp.float32)
            + vec(_BO, H))
    x1 = _layernorm(x + attn, vec(_LN1G, H), vec(_LN1B, H))
    # TODO(synk): HF BERT uses exact erf GELU; tanh approximation kept for the synthetic layer.
    ff = jax.nn.gelu(jnp.dot(x1, wmat_ref[:, 4 * H:], preferred_element_type=jnp.float32)
                     + vec(_BFF1, FF))
    ff = jnp.dot(ff, wff2_ref[...], preferred_element_type=jnp.float32) + vec(_BFF2, H)
    enc = _layernorm(x1 + ff, vec(_LN2G, H), vec(_LN2B, H))        # (BS, H)

    # ---- text-CNN: all taps and all filter widths fused into ONE matmul ----
    # tap dk = rows shifted up by dk (wrap); wrapped / tail rows are zeroed by the packed
    # mask below, and ReLU >= 0 keeps 0 neutral in the max-pool.
    taps = [enc] + [jnp.concatenate([enc[dk:, :], enc[:dk, :]], axis=0)
                    for dk in range(1, KMAX)]
    shifted = jnp.concatenate(taps, axis=1)                        # (BS, KMAX*H)
    acc = jnp.dot(shifted, conv_ref[:KMAX * H, :],
                  preferred_element_type=jnp.float32)              # (BS, CF)
    acc = jnp.maximum(acc + vec(_BCONV, CF), 0.0)                  # bias + ReLU
    acc = acc * conv_ref[KMAX * H:, :]                             # precomputed {0,1} tail mask
    feat = jnp.concatenate(
        [jnp.max(acc[b * S:(b + 1) * S, :], axis=0, keepdims=True) for b in range(B)],
        axis=0)                                                    # (B, CF) global max-pool
    # dropout is identity at inference (nn.Dropout eval mode)

    # ---- final Linear, lane-dense (padded to NL_PAD) ----
    out_ref[...] = (jnp.dot(feat, fcw_ref[...], preferred_element_type=jnp.float32)
                    + vec(_BFC, NL_PAD))


# ---------------------------------------------------------------------------
# Parameters (deterministic, synthetic) + one-time packing into lane-aligned slabs
# ---------------------------------------------------------------------------
def init_params(key):
    ks = iter(jax.random.split(key, 40))
    g = lambda shape: (0.02 * jax.random.normal(next(ks), shape)).astype(jnp.float32)
    ones = lambda shape: jnp.ones(shape, jnp.float32)
    zeros = lambda shape: jnp.zeros(shape, jnp.float32)
    return dict(
        tok_emb=g((V, H)), pos_emb=g((S, H)), type_emb=g((2, H)),
        ln0_g=ones((1, H)), ln0_b=zeros((1, H)),
        wq=g((H, H)), bq=zeros((1, H)),
        wk=g((H, H)), bk=zeros((1, H)),
        wv=g((H, H)), bv=zeros((1, H)),
        wo=g((H, H)), bo=zeros((1, H)),
        ln1_g=ones((1, H)), ln1_b=zeros((1, H)),
        w_ff1=g((H, FF)), b_ff1=zeros((1, FF)),
        w_ff2=g((FF, H)), b_ff2=zeros((1, H)),
        ln2_g=ones((1, H)), ln2_b=zeros((1, H)),
        conv_ws=[g((kk, H, NF)) for kk in FILTER_SIZES],
        conv_bs=[zeros((1, NF)) for _ in FILTER_SIZES],
        fc_w=g((CF, NL)),
        fc_b=zeros((1, NL)),
    )


def pack_params(p):
    """Called ONCE at init (hoisted out of the forward path)."""
    padrow = lambda v: jnp.pad(v, ((0, 0), (0, VLANE - v.shape[1])))
    rows = [p["ln0_g"], p["ln0_b"], p["ln1_g"], p["ln1_b"], p["ln2_g"], p["ln2_b"],
            p["bo"], p["b_ff2"],
            jnp.concatenate([p["bq"], p["bk"], p["bv"]], axis=1),
            p["b_ff1"],
            jnp.concatenate(p["conv_bs"], axis=1),
            p["fc_b"]]
    vecs = jnp.concatenate([padrow(r) for r in rows], axis=0)
    vecs = jnp.pad(vecs, ((0, VROWS - vecs.shape[0]), (0, 0)))          # (16, 128)

    wmat = jnp.concatenate([p["wq"], p["wk"], p["wv"], p["wo"], p["w_ff1"]], axis=1)  # (H,256)

    # conv taps packed as (KMAX*H, CF), zero-padded past each filter's width
    conv_w = jnp.zeros((KMAX * H, CF), jnp.float32)
    for i, ksz in enumerate(FILTER_SIZES):
        for dk in range(ksz):
            conv_w = conv_w.at[dk * H:(dk + 1) * H, i * NF:(i + 1) * NF].set(
                p["conv_ws"][i][dk])
    # {0,1} mask zeroing rows past each filter's valid conv length (per batch position)
    pos = jnp.arange(S)[:, None]                                        # (S, 1)
    lim = jnp.asarray([S - kk + 1 for kk in FILTER_SIZES], jnp.int32)   # (NFILT,)
    conv_mask = (pos < lim[None, :]).astype(jnp.float32)                # (S, NFILT)
    conv_mask = jnp.repeat(conv_mask, NF, axis=1)                       # (S, CF)
    conv_mask = jnp.tile(conv_mask, (B, 1))                             # (BS, CF)
    convslab = jnp.concatenate([conv_w, conv_mask], axis=0)             # (KMAX*H + BS, CF)

    return dict(
        vecs=vecs, wmat=wmat, w_ff2=p["w_ff2"], convslab=convslab,
        fc_w=jnp.pad(p["fc_w"], ((0, 0), (0, NL_PAD - NL))),
        tok_emb=p["tok_emb"], pos_emb=p["pos_emb"], type_emb=p["type_emb"],
    )


# ---------------------------------------------------------------------------
# Forward: embedding gathers + mask construction (glue) + the fused kernel
# ---------------------------------------------------------------------------
@jax.jit
def bert_cnn_forward(context, token_type, mask, w):
    # TODO(synk): BertModel.from_pretrained has 12 pretrained layers + pooler (text_cls,
    # unused by this forward); checkpoints cannot be loaded, so one synthetic layer stands in.
    emb = (w["tok_emb"][context] + w["pos_emb"][None, :, :]
           + w["type_emb"][token_type]).astype(jnp.float32)
    x2 = emb.reshape(BS, H)
    # block-diagonal (same-batch) + key-padding additive mask over the flattened seq axis
    bid = jnp.arange(BS, dtype=jnp.int32) // S
    same = (bid[:, None] == bid[None, :]).astype(jnp.float32)           # (BS, BS)
    keyok = mask.astype(jnp.float32).reshape(1, BS)                     # (1, BS)
    mask_add = (same * keyok - 1.0) * 1e9                               # 0 valid / -1e9 masked

    out = pl.pallas_call(
        _fused_kernel,
        out_shape=jax.ShapeDtypeStruct((B, NL_PAD), jnp.float32),
    )(x2, mask_add, w["vecs"], w["wmat"], w["w_ff2"], w["convslab"], w["fc_w"])
    return out[:, :NL]


# ---------------------------------------------------------------------------
# Pure-JAX reference (uses the unpacked params) for a sanity check.
# ---------------------------------------------------------------------------
def reference_forward(context, token_type, mask, p):
    x = p["tok_emb"][context] + p["pos_emb"][None, :, :] + p["type_emb"][token_type]
    x = _layernorm(x, p["ln0_g"], p["ln0_b"])
    m_add = (1.0 - mask.astype(jnp.float32))[:, None, None, :] * (-1e9)   # (B,1,1,S)
    q = x @ p["wq"] + p["bq"]
    k = x @ p["wk"] + p["bk"]
    v = x @ p["wv"] + p["bv"]
    sp = lambda t: t.reshape(B, S, NH, DH).transpose(0, 2, 1, 3)          # (B,NH,S,DH)
    s = jnp.einsum("bhqd,bhkd->bhqk", sp(q), sp(k)) / math.sqrt(DH) + m_add
    pr = jax.nn.softmax(s, axis=-1)
    ctx = jnp.einsum("bhqk,bhkd->bhqd", pr, sp(v)).transpose(0, 2, 1, 3).reshape(B, S, H)
    x1 = _layernorm(x + ctx @ p["wo"] + p["bo"], p["ln1_g"], p["ln1_b"])
    ff = jax.nn.gelu(x1 @ p["w_ff1"] + p["b_ff1"]) @ p["w_ff2"] + p["b_ff2"]
    enc = _layernorm(x1 + ff, p["ln2_g"], p["ln2_b"])
    feats = []
    for i, kk in enumerate(FILTER_SIZES):
        L = S - kk + 1
        conv = sum(enc[:, dk:dk + L, :] @ p["conv_ws"][i][dk] for dk in range(kk))
        conv = jax.nn.relu(conv + p["conv_bs"][i][None])
        feats.append(jnp.max(conv, axis=1))                               # (B, NF)
    feat = jnp.concatenate(feats, axis=1)                                 # (B, CF)
    return feat @ p["fc_w"] + p["fc_b"]


if __name__ == "__main__":
    key = jax.random.PRNGKey(0)
    pkey, ckey = jax.random.split(key)
    params = init_params(pkey)
    packed = pack_params(params)          # packing hoisted: runs once, not per forward

    context = jax.random.randint(ckey, (B, S), 0, V, dtype=jnp.int32)         # x[0]
    token_type = jnp.zeros((B, S), jnp.int32)                                 # x[1]
    mask = jnp.concatenate([jnp.ones((B, S - 3), jnp.int32),
                            jnp.zeros((B, 3), jnp.int32)], axis=1)            # x[2]

    logits = bert_cnn_forward(context, token_type, mask, packed)
    jax.block_until_ready(logits)
    assert logits.shape == (B, NL) and logits.dtype == jnp.float32
    assert bool(jnp.all(jnp.isfinite(logits)))

    with jax.default_matmul_precision("float32"):
        ref = reference_forward(context, token_type, mask, params)
    # loose tolerance: in-kernel softmax uses the EUP approximate reciprocal
    assert bool(jnp.allclose(logits, ref, rtol=2e-2, atol=5e-3)), (logits, ref)

    print("KERNEL_OK")
</pallas_src>

<mosaic_0001>
module attributes {stable_mosaic.version = 11 : i64} {
  func.func @_fused_kernel(%arg0: memref<32x32xf32, #tpu.memory_space<vmem>>, %arg1: memref<32x32xf32, #tpu.memory_space<vmem>>, %arg2: memref<16x128xf32, #tpu.memory_space<vmem>>, %arg3: memref<32x256xf32, #tpu.memory_space<vmem>>, %arg4: memref<128x32xf32, #tpu.memory_space<vmem>>, %arg5: memref<160x24xf32, #tpu.memory_space<vmem>>, %arg6: memref<24x128xf32, #tpu.memory_space<vmem>>, %arg7: memref<2x128xf32, #tpu.memory_space<vmem>>) attributes {dimension_semantics = [], scalar_prefetch = 0 : i64, scratch_operands = 0 : i64, tpu.core_type = #tpu.core_type<tc>} {
    %c0 = arith.constant 0 : index
    %c0_0 = arith.constant 0 : index
    %0 = vector.load %arg0[%c0, %c0_0] : memref<32x32xf32, #tpu.memory_space<vmem>>, vector<32x32xf32>
    %c0_1 = arith.constant 0 : index
    %c0_2 = arith.constant 0 : index
    %1 = vector.load %arg2[%c0_1, %c0_2] : memref<16x128xf32, #tpu.memory_space<vmem>>, vector<1x32xf32>
    %c1 = arith.constant 1 : index
    %c0_3 = arith.constant 0 : index
    %2 = vector.load %arg2[%c1, %c0_3] : memref<16x128xf32, #tpu.memory_space<vmem>>, vector<1x32xf32>
    %cst = arith.constant dense<0.000000e+00> : vector<32xf32>
    %3 = vector.multi_reduction <add>, %0, %cst [1] : vector<32x32xf32> to vector<32xf32>
    %4 = vector.shape_cast %3 : vector<32xf32> to vector<32x1xf32>
    %cst_4 = arith.constant 3.200000e+01 : f32
    %5 = vector.broadcast %cst_4 : f32 to vector<32x1xf32>
    %6 = arith.divf %4, %5 : vector<32x1xf32>
    %7 = vector.broadcast %6 : vector<32x1xf32> to vector<32x32xf32>
    %8 = arith.subf %0, %7 : vector<32x32xf32>
    %9 = arith.mulf %8, %8 : vector<32x32xf32>
    %cst_5 = arith.constant dense<0.000000e+00> : vector<32xf32>
    %10 = vector.multi_reduction <add>, %9, %cst_5 [1] : vector<32x32xf32> to vector<32xf32>
    %11 = vector.shape_cast %10 : vector<32xf32> to vector<32x1xf32>
    %cst_6 = arith.constant 3.200000e+01 : f32
    %12 = vector.broadcast %cst_6 : f32 to vector<32x1xf32>
    %13 = arith.divf %11, %12 : vector<32x1xf32>
    %14 = vector.broadcast %6 : vector<32x1xf32> to vector<32x32xf32>
    %15 = arith.subf %0, %14 : vector<32x32xf32>
    %cst_7 = arith.constant 9.99999996E-13 : f32
    %16 = vector.broadcast %cst_7 : f32 to vector<32x1xf32>
    %17 = arith.addf %13, %16 : vector<32x1xf32>
    %18 = math.rsqrt %17 : vector<32x1xf32>
    %19 = vector.broadcast %18 : vector<32x1xf32> to vector<32x32xf32>
    %20 = arith.mulf %15, %19 : vector<32x32xf32>
    %21 = vector.broadcast %1 : vector<1x32xf32> to vector<32x32xf32>
    %22 = arith.mulf %20, %21 : vector<32x32xf32>
    %23 = vector.broadcast %2 : vector<1x32xf32> to vector<32x32xf32>
    %24 = arith.addf %22, %23 : vector<32x32xf32>
    %c0_8 = arith.constant 0 : index
    %c0_9 = arith.constant 0 : index
    %25 = vector.load %arg3[%c0_8, %c0_9] : memref<32x256xf32, #tpu.memory_space<vmem>>, vector<32x96xf32>
    %cst_10 = arith.constant dense<0.000000e+00> : vector<32x96xf32>
    %26 = tpu.matmul %24, %25, %cst_10 {dimension_numbers = #tpu.dot_dimension_numbers<[1], [0], [0], [1], [0, 0, 1, 1], [], []>} : vector<32x32xf32>, vector<32x96xf32>, vector<32x96xf32> -> vector<32x96xf32>
    %c8 = arith.constant 8 : index
    %c0_11 = arith.constant 0 : index
    %27 = vector.load %arg2[%c8, %c0_11] : memref<16x128xf32, #tpu.memory_space<vmem>>, vector<1x96xf32>
    %28 = vector.broadcast %27 : vector<1x96xf32> to vector<32x96xf32>
    %29 = arith.addf %26, %28 : vector<32x96xf32>
    %30 = vector.extract_strided_slice %29 {offsets = [0, 0], sizes = [32, 32], strides = [1, 1]} : vector<32x96xf32> to vector<32x32xf32>
    %31 = vector.extract_strided_slice %29 {offsets = [0, 32], sizes = [32, 32], strides = [1, 1]} : vector<32x96xf32> to vector<32x32xf32>
    %32 = vector.extract_strided_slice %29 {offsets = [0, 64], sizes = [32, 32], strides = [1, 1]} : vector<32x96xf32> to vector<32x32xf32>
    %33 = vector.extract_strided_slice %30 {offsets = [0, 0], sizes = [32, 8], strides = [1, 1]} : vector<32x32xf32> to vector<32x8xf32>
    %34 = vector.extract_strided_slice %30 {offsets = [0, 8], sizes = [32, 8], strides = [1, 1]} : vector<32x32xf32> to vector<32x8xf32>
    %35 = vector.extract_strided_slice %30 {offsets = [0, 16], sizes = [32, 8], strides = [1, 1]} : vector<32x32xf32> to vector<32x8xf32>
    %36 = vector.extract_strided_slice %30 {offsets = [0, 24], sizes = [32, 8], strides = [1, 1]} : vector<32x32xf32> to vector<32x8xf32>
    %37 = vector.shape_cast %33 : vector<32x8xf32> to vector<1x32x8xf32>
    %38 = vector.shape_cast %34 : vector<32x8xf32> to vector<1x32x8xf32>
    %39 = vector.shape_cast %35 : vector<32x8xf32> to vector<1x32x8xf32>
    %40 = vector.shape_cast %36 : vector<32x8xf32> to vector<1x32x8xf32>
    %41 = tpu.concatenate %37, %38, %39, %40 in 0 : vector<1x32x8xf32>, vector<1x32x8xf32>, vector<1x32x8xf32>, vector<1x32x8xf32> -> vector<4x32x8xf32>
    %42 = vector.extract_strided_slice %31 {offsets = [0, 0], sizes = [32, 8], strides = [1, 1]} : vector<32x32xf32> to vector<32x8xf32>
    %43 = vector.extract_strided_slice %31 {offsets = [0, 8], sizes = [32, 8], strides = [1, 1]} : vector<32x32xf32> to vector<32x8xf32>
    %44 = vector.extract_strided_slice %31 {offsets = [0, 16], sizes = [32, 8], strides = [1, 1]} : vector<32x32xf32> to vector<32x8xf32>
    %45 = vector.extract_strided_slice %31 {offsets = [0, 24], sizes = [32, 8], strides = [1, 1]} : vector<32x32xf32> to vector<32x8xf32>
    %46 = vector.shape_cast %42 : vector<32x8xf32> to vector<1x32x8xf32>
    %47 = vector.shape_cast %43 : vector<32x8xf32> to vector<1x32x8xf32>
    %48 = vector.shape_cast %44 : vector<32x8xf32> to vector<1x32x8xf32>
    %49 = vector.shape_cast %45 : vector<32x8xf32> to vector<1x32x8xf32>
    %50 = tpu.concatenate %46, %47, %48, %49 in 0 : vector<1x32x8xf32>, vector<1x32x8xf32>, vector<1x32x8xf32>, vector<1x32x8xf32> -> vector<4x32x8xf32>
    %51 = vector.extract_strided_slice %32 {offsets = [0, 0], sizes = [32, 8], strides = [1, 1]} : vector<32x32xf32> to vector<32x8xf32>
    %52 = vector.extract_strided_slice %32 {offsets = [0, 8], sizes = [32, 8], strides = [1, 1]} : vector<32x32xf32> to vector<32x8xf32>
    %53 = vector.extract_strided_slice %32 {offsets = [0, 16], sizes = [32, 8], strides = [1, 1]} : vector<32x32xf32> to vector<32x8xf32>
    %54 = vector.extract_strided_slice %32 {offsets = [0, 24], sizes = [32, 8], strides = [1, 1]} : vector<32x32xf32> to vector<32x8xf32>
    %55 = vector.shape_cast %51 : vector<32x8xf32> to vector<1x32x8xf32>
    %56 = vector.shape_cast %52 : vector<32x8xf32> to vector<1x32x8xf32>
    %57 = vector.shape_cast %53 : vector<32x8xf32> to vector<1x32x8xf32>
    %58 = vector.shape_cast %54 : vector<32x8xf32> to vector<1x32x8xf32>
    %59 = tpu.concatenate %55, %56, %57, %58 in 0 : vector<1x32x8xf32>, vector<1x32x8xf32>, vector<1x32x8xf32>, vector<1x32x8xf32> -> vector<4x32x8xf32>
    "tpu.trace_start"() <{level = 10 : i32, message = "hqd,hkd->hqk"}> : () -> ()
    %cst_12 = arith.constant dense<0.000000e+00> : vector<4x32x32xf32>
    %60 = tpu.matmul %41, %50, %cst_12 {dimension_numbers = #tpu.dot_dimension_numbers<[2], [2], [1], [1], [0, 0, 0, 1, 1, 1], [0], [0]>} : vector<4x32x8xf32>, vector<4x32x8xf32>, vector<4x32x32xf32> -> vector<4x32x32xf32>
    "tpu.trace_stop"() : () -> ()
    %cst_13 = arith.constant 0.353553385 : f32
    %61 = vector.broadcast %cst_13 : f32 to vector<4x32x32xf32>
    %62 = arith.mulf %60, %61 : vector<4x32x32xf32>
    %c0_14 = arith.constant 0 : index
    %c0_15 = arith.constant 0 : index
    %63 = vector.load %arg1[%c0_14, %c0_15] : memref<32x32xf32, #tpu.memory_space<vmem>>, vector<32x32xf32>
    %64 = vector.shape_cast %63 : vector<32x32xf32> to vector<1x32x32xf32>
    %65 = vector.broadcast %64 : vector<1x32x32xf32> to vector<4x32x32xf32>
    %66 = arith.addf %62, %65 : vector<4x32x32xf32>
    %cst_16 = arith.constant dense<0xFF800000> : vector<4x32xf32>
    %67 = vector.multi_reduction <maximumf>, %66, %cst_16 [2] : vector<4x32x32xf32> to vector<4x32xf32>
    %68 = vector.shape_cast %67 : vector<4x32xf32> to vector<4x32x1xf32>
    %69 = vector.broadcast %68 : vector<4x32x1xf32> to vector<4x32x32xf32>
    %70 = arith.subf %66, %69 : vector<4x32x32xf32>
    %71 = math.exp %70 : vector<4x32x32xf32>
    %cst_17 = arith.constant dense<0.000000e+00> : vector<4x32xf32>
    %72 = vector.multi_reduction <add>, %71, %cst_17 [2] : vector<4x32x32xf32> to vector<4x32xf32>
    %73 = vector.shape_cast %72 : vector<4x32xf32> to vector<4x32x1xf32>
    %74 = tpu.reciprocal %73 {approx = true} : vector<4x32x1xf32> -> vector<4x32x1xf32>
    %75 = vector.broadcast %74 : vector<4x32x1xf32> to vector<4x32x32xf32>
    %76 = arith.mulf %71, %75 : vector<4x32x32xf32>
    "tpu.trace_start"() <{level = 10 : i32, message = "hqk,hkd->hqd"}> : () -> ()
    %cst_18 = arith.constant dense<0.000000e+00> : vector<4x32x8xf32>
    %77 = tpu.matmul %76, %59, %cst_18 {dimension_numbers = #tpu.dot_dimension_numbers<[2], [1], [1], [2], [0, 0, 0, 1, 1, 2], [0], [0]>} : vector<4x32x32xf32>, vector<4x32x8xf32>, vector<4x32x8xf32> -> vector<4x32x8xf32>
    "tpu.trace_stop"() : () -> ()
    %78 = vector.extract_strided_slice %77 {offsets = [0, 0, 0], sizes = [1, 32, 8], strides = [1, 1, 1]} : vector<4x32x8xf32> to vector<1x32x8xf32>
    %79 = vector.shape_cast %78 : vector<1x32x8xf32> to vector<32x8xf32>
    %80 = vector.extract_strided_slice %77 {offsets = [1, 0, 0], sizes = [1, 32, 8], strides = [1, 1, 1]} : vector<4x32x8xf32> to vector<1x32x8xf32>
    %81 = vector.shape_cast %80 : vector<1x32x8xf32> to vector<32x8xf32>
    %82 = vector.extract_strided_slice %77 {offsets = [2, 0, 0], sizes = [1, 32, 8], strides = [1, 1, 1]} : vector<4x32x8xf32> to vector<1x32x8xf32>
    %83 = vector.shape_cast %82 : vector<1x32x8xf32> to vector<32x8xf32>
    %84 = vector.extract_strided_slice %77 {offsets = [3, 0, 0], sizes = [1, 32, 8], strides = [1, 1, 1]} : vector<4x32x8xf32> to vector<1x32x8xf32>
    %85 = vector.shape_cast %84 : vector<1x32x8xf32> to vector<32x8xf32>
    %86 = tpu.concatenate %79, %81, %83, %85 in 1 : vector<32x8xf32>, vector<32x8xf32>, vector<32x8xf32>, vector<32x8xf32> -> vector<32x32xf32>
    %c0_19 = arith.constant 0 : index
    %c96 = arith.constant 96 : index
    %87 = vector.load %arg3[%c0_19, %c96] : memref<32x256xf32, #tpu.memory_space<vmem>>, vector<32x32xf32>
    %cst_20 = arith.constant dense<0.000000e+00> : vector<32x32xf32>
    %88 = tpu.matmul %86, %87, %cst_20 {dimension_numbers = #tpu.dot_dimension_numbers<[1], [0], [0], [1], [0, 0, 1, 1], [], []>} : vector<32x32xf32>, vector<32x32xf32>, vector<32x32xf32> -> vector<32x32xf32>
    %c6 = arith.constant 6 : index
    %c0_21 = arith.constant 0 : index
    %89 = vector.load %arg2[%c6, %c0_21] : memref<16x128xf32, #tpu.memory_space<vmem>>, vector<1x32xf32>
    %90 = vector.broadcast %89 : vector<1x32xf32> to vector<32x32xf32>
    %91 = arith.addf %88, %90 : vector<32x32xf32>
    %92 = arith.addf %24, %91 : vector<32x32xf32>
    %c2 = arith.constant 2 : index
    %c0_22 = arith.constant 0 : index
    %93 = vector.load %arg2[%c2, %c0_22] : memref<16x128xf32, #tpu.memory_space<vmem>>, vector<1x32xf32>
    %c3 = arith.constant 3 : index
    %c0_23 = arith.constant 0 : index
    %94 = vector.load %arg2[%c3, %c0_23] : memref<16x128xf32, #tpu.memory_space<vmem>>, vector<1x32xf32>
    %cst_24 = arith.constant dense<0.000000e+00> : vector<32xf32>
    %95 = vector.multi_reduction <add>, %92, %cst_24 [1] : vector<32x32xf32> to vector<32xf32>
    %96 = vector.shape_cast %95 : vector<32xf32> to vector<32x1xf32>
    %cst_25 = arith.constant 3.200000e+01 : f32
    %97 = vector.broadcast %cst_25 : f32 to vector<32x1xf32>
    %98 = arith.divf %96, %97 : vector<32x1xf32>
    %99 = vector.broadcast %98 : vector<32x1xf32> to vector<32x32xf32>
    %100 = arith.subf %92, %99 : vector<32x32xf32>
    %101 = arith.mulf %100, %100 : vector<32x32xf32>
    %cst_26 = arith.constant dense<0.000000e+00> : vector<32xf32>
    %102 = vector.multi_reduction <add>, %101, %cst_26 [1] : vector<32x32xf32> to vector<32xf32>
    %103 = vector.shape_cast %102 : vector<32xf32> to vector<32x1xf32>
    %cst_27 = arith.constant 3.200000e+01 : f32
    %104 = vector.broadcast %cst_27 : f32 to vector<32x1xf32>
    %105 = arith.divf %103, %104 : vector<32x1xf32>
    %106 = vector.broadcast %98 : vector<32x1xf32> to vector<32x32xf32>
    %107 = arith.subf %92, %106 : vector<32x32xf32>
    %cst_28 = arith.constant 9.99999996E-13 : f32
    %108 = vector.broadcast %cst_28 : f32 to vector<32x1xf32>
    %109 = arith.addf %105, %108 : vector<32x1xf32>
    %110 = math.rsqrt %109 : vector<32x1xf32>
    %111 = vector.broadcast %110 : vector<32x1xf32> to vector<32x32xf32>
    %112 = arith.mulf %107, %111 : vector<32x32xf32>
    %113 = vector.broadcast %93 : vector<1x32xf32> to vector<32x32xf32>
    %114 = arith.mulf %112, %113 : vector<32x32xf32>
    %115 = vector.broadcast %94 : vector<1x32xf32> to vector<32x32xf32>
    %116 = arith.addf %114, %115 : vector<32x32xf32>
    %c0_29 = arith.constant 0 : index
    %c128 = arith.constant 128 : index
    %117 = vector.load %arg3[%c0_29, %c128] : memref<32x256xf32, #tpu.memory_space<vmem>>, vector<32x128xf32>
    %cst_30 = arith.constant dense<0.000000e+00> : vector<32x128xf32>
    %118 = tpu.matmul %116, %117, %cst_30 {dimension_numbers = #tpu.dot_dimension_numbers<[1], [0], [0], [1], [0, 0, 1, 1], [], []>} : vector<32x32xf32>, vector<32x128xf32>, vector<32x128xf32> -> vector<32x128xf32>
    %c9 = arith.constant 9 : index
    %c0_31 = arith.constant 0 : index
    %119 = vector.load %arg2[%c9, %c0_31] : memref<16x128xf32, #tpu.memory_space<vmem>>, vector<1x128xf32>
    %120 = vector.broadcast %119 : vector<1x128xf32> to vector<32x128xf32>
    %121 = arith.addf %118, %120 : vector<32x128xf32>
    %122 = arith.mulf %121, %121 : vector<32x128xf32>
    %123 = arith.mulf %121, %122 : vector<32x128xf32>
    %cst_32 = arith.constant 4.471500e-02 : f32
    %124 = vector.broadcast %cst_32 : f32 to vector<32x128xf32>
    %125 = arith.mulf %124, %123 : vector<32x128xf32>
    %126 = arith.addf %121, %125 : vector<32x128xf32>
    %cst_33 = arith.constant 0.797884583 : f32
    %127 = vector.broadcast %cst_33 : f32 to vector<32x128xf32>
    %128 = arith.mulf %127, %126 : vector<32x128xf32>
    %129 = math.tanh %128 : vector<32x128xf32>
    %cst_34 = arith.constant 1.000000e+00 : f32
    %130 = vector.broadcast %cst_34 : f32 to vector<32x128xf32>
    %131 = arith.addf %130, %129 : vector<32x128xf32>
    %cst_35 = arith.constant 5.000000e-01 : f32
    %132 = vector.broadcast %cst_35 : f32 to vector<32x128xf32>
    %133 = arith.mulf %132, %131 : vector<32x128xf32>
    %134 = arith.mulf %121, %133 : vector<32x128xf32>
    %c0_36 = arith.constant 0 : index
    %c0_37 = arith.constant 0 : index
    %135 = vector.load %arg4[%c0_36, %c0_37] : memref<128x32xf32, #tpu.memory_space<vmem>>, vector<128x32xf32>
    %cst_38 = arith.constant dense<0.000000e+00> : vector<32x32xf32>
    %136 = tpu.matmul %134, %135, %cst_38 {dimension_numbers = #tpu.dot_dimension_numbers<[1], [0], [0], [1], [0, 0, 1, 1], [], []>} : vector<32x128xf32>, vector<128x32xf32>, vector<32x32xf32> -> vector<32x32xf32>
    %c7 = arith.constant 7 : index
    %c0_39 = arith.constant 0 : index
    %137 = vector.load %arg2[%c7, %c0_39] : memref<16x128xf32, #tpu.memory_space<vmem>>, vector<1x32xf32>
    %138 = vector.broadcast %137 : vector<1x32xf32> to vector<32x32xf32>
    %139 = arith.addf %136, %138 : vector<32x32xf32>
    %140 = arith.addf %116, %139 : vector<32x32xf32>
    %c4 = arith.constant 4 : index
    %c0_40 = arith.constant 0 : index
    %141 = vector.load %arg2[%c4, %c0_40] : memref<16x128xf32, #tpu.memory_space<vmem>>, vector<1x32xf32>
    %c5 = arith.constant 5 : index
    %c0_41 = arith.constant 0 : index
    %142 = vector.load %arg2[%c5, %c0_41] : memref<16x128xf32, #tpu.memory_space<vmem>>, vector<1x32xf32>
    %cst_42 = arith.constant dense<0.000000e+00> : vector<32xf32>
    %143 = vector.multi_reduction <add>, %140, %cst_42 [1] : vector<32x32xf32> to vector<32xf32>
    %144 = vector.shape_cast %143 : vector<32xf32> to vector<32x1xf32>
    %cst_43 = arith.constant 3.200000e+01 : f32
    %145 = vector.broadcast %cst_43 : f32 to vector<32x1xf32>
    %146 = arith.divf %144, %145 : vector<32x1xf32>
    %147 = vector.broadcast %146 : vector<32x1xf32> to vector<32x32xf32>
    %148 = arith.subf %140, %147 : vector<32x32xf32>
    %149 = arith.mulf %148, %148 : vector<32x32xf32>
    %cst_44 = arith.constant dense<0.000000e+00> : vector<32xf32>
    %150 = vector.multi_reduction <add>, %149, %cst_44 [1] : vector<32x32xf32> to vector<32xf32>
    %151 = vector.shape_cast %150 : vector<32xf32> to vector<32x1xf32>
    %cst_45 = arith.constant 3.200000e+01 : f32
    %152 = vector.broadcast %cst_45 : f32 to vector<32x1xf32>
    %153 = arith.divf %151, %152 : vector<32x1xf32>
    %154 = vector.broadcast %146 : vector<32x1xf32> to vector<32x32xf32>
    %155 = arith.subf %140, %154 : vector<32x32xf32>
    %cst_46 = arith.constant 9.99999996E-13 : f32
    %156 = vector.broadcast %cst_46 : f32 to vector<32x1xf32>
    %157 = arith.addf %153, %156 : vector<32x1xf32>
    %158 = math.rsqrt %157 : vector<32x1xf32>
    %159 = vector.broadcast %158 : vector<32x1xf32> to vector<32x32xf32>
    %160 = arith.mulf %155, %159 : vector<32x32xf32>
    %161 = vector.broadcast %141 : vector<1x32xf32> to vector<32x32xf32>
    %162 = arith.mulf %160, %161 : vector<32x32xf32>
    %163 = vector.broadcast %142 : vector<1x32xf32> to vector<32x32xf32>
    %164 = arith.addf %162, %163 : vector<32x32xf32>
    %165 = vector.extract_strided_slice %164 {offsets = [1, 0], sizes = [31, 32], strides = [1, 1]} : vector<32x32xf32> to vector<31x32xf32>
    %166 = vector.extract_strided_slice %164 {offsets = [0, 0], sizes = [1, 32], strides = [1, 1]} : vector<32x32xf32> to vector<1x32xf32>
    %167 = tpu.concatenate %165, %166 in 0 : vector<31x32xf32>, vector<1x32xf32> -> vector<32x32xf32>
    %168 = vector.extract_strided_slice %164 {offsets = [2, 0], sizes = [30, 32], strides = [1, 1]} : vector<32x32xf32> to vector<30x32xf32>
    %169 = vector.extract_strided_slice %164 {offsets = [0, 0], sizes = [2, 32], strides = [1, 1]} : vector<32x32xf32> to vector<2x32xf32>
    %170 = tpu.concatenate %168, %169 in 0 : vector<30x32xf32>, vector<2x32xf32> -> vector<32x32xf32>
    %171 = vector.extract_strided_slice %164 {offsets = [3, 0], sizes = [29, 32], strides = [1, 1]} : vector<32x32xf32> to vector<29x32xf32>
    %172 = vector.extract_strided_slice %164 {offsets = [0, 0], sizes = [3, 32], strides = [1, 1]} : vector<32x32xf32> to vector<3x32xf32>
    %173 = tpu.concatenate %171, %172 in 0 : vector<29x32xf32>, vector<3x32xf32> -> vector<32x32xf32>
    %174 = tpu.concatenate %164, %167, %170, %173 in 1 : vector<32x32xf32>, vector<32x32xf32>, vector<32x32xf32>, vector<32x32xf32> -> vector<32x128xf32>
    %c0_47 = arith.constant 0 : index
    %c0_48 = arith.constant 0 : index
    %175 = vector.load %arg5[%c0_47, %c0_48] : memref<160x24xf32, #tpu.memory_space<vmem>>, vector<128x24xf32>
    %cst_49 = arith.constant dense<0.000000e+00> : vector<32x24xf32>
    %176 = tpu.matmul %174, %175, %cst_49 {dimension_numbers = #tpu.dot_dimension_numbers<[1], [0], [0], [1], [0, 0, 1, 1], [], []>} : vector<32x128xf32>, vector<128x24xf32>, vector<32x24xf32> -> vector<32x24xf32>
    %c10 = arith.constant 10 : index
    %c0_50 = arith.constant 0 : index
    %177 = vector.load %arg2[%c10, %c0_50] : memref<16x128xf32, #tpu.memory_space<vmem>>, vector<1x24xf32>
    %178 = vector.broadcast %177 : vector<1x24xf32> to vector<32x24xf32>
    %179 = arith.addf %176, %178 : vector<32x24xf32>
    %cst_51 = arith.constant 0.000000e+00 : f32
    %180 = vector.broadcast %cst_51 : f32 to vector<32x24xf32>
    %181 = arith.maximumf %179, %180 : vector<32x24xf32>
    %c128_52 = arith.constant 128 : index
    %c0_53 = arith.constant 0 : index
    %182 = vector.load %arg5[%c128_52, %c0_53] : memref<160x24xf32, #tpu.memory_space<vmem>>, vector<32x24xf32>
    %183 = arith.mulf %181, %182 : vector<32x24xf32>
    %184 = vector.extract_strided_slice %183 {offsets = [0, 0], sizes = [16, 24], strides = [1, 1]} : vector<32x24xf32> to vector<16x24xf32>
    %cst_54 = arith.constant dense<0xFF800000> : vector<24xf32>
    %185 = vector.multi_reduction <maximumf>, %184, %cst_54 [0] : vector<16x24xf32> to vector<24xf32>
    %186 = vector.shape_cast %185 : vector<24xf32> to vector<1x24xf32>
    %187 = vector.extract_strided_slice %183 {offsets = [16, 0], sizes = [16, 24], strides = [1, 1]} : vector<32x24xf32> to vector<16x24xf32>
    %cst_55 = arith.constant dense<0xFF800000> : vector<24xf32>
    %188 = vector.multi_reduction <maximumf>, %187, %cst_55 [0] : vector<16x24xf32> to vector<24xf32>
    %189 = vector.shape_cast %188 : vector<24xf32> to vector<1x24xf32>
    %190 = tpu.concatenate %186, %189 in 0 : vector<1x24xf32>, vector<1x24xf32> -> vector<2x24xf32>
    %c0_56 = arith.constant 0 : index
    %c0_57 = arith.constant 0 : index
    %191 = vector.load %arg6[%c0_56, %c0_57] : memref<24x128xf32, #tpu.memory_space<vmem>>, vector<24x128xf32>
    %cst_58 = arith.constant dense<0.000000e+00> : vector<2x128xf32>
    %192 = tpu.matmul %190, %191, %cst_58 {dimension_numbers = #tpu.dot_dimension_numbers<[1], [0], [0], [1], [0, 0, 1, 1], [], []>} : vector<2x24xf32>, vector<24x128xf32>, vector<2x128xf32> -> vector<2x128xf32>
    %c11 = arith.constant 11 : index
    %c0_59 = arith.constant 0 : index
    %193 = vector.load %arg2[%c11, %c0_59] : memref<16x128xf32, #tpu.memory_space<vmem>>, vector<1x128xf32>
    %194 = vector.broadcast %193 : vector<1x128xf32> to vector<2x128xf32>
    %195 = arith.addf %192, %194 : vector<2x128xf32>
    %c0_60 = arith.constant 0 : index
    %c0_61 = arith.constant 0 : index
    %196 = vector.load %arg7[%c0_60, %c0_61] : memref<2x128xf32, #tpu.memory_space<vmem>>, vector<2x128xf32>
    tpu.vector_store %arg7[%c0_60, %c0_61], %195 {strides = array<i32>} : memref<2x128xf32, #tpu.memory_space<vmem>>, vector<2x128xf32>,
    return
  }
}

</mosaic_0001>

<llo_original>
// kernel: mul.8
$region0: #{mul.8}
  %s0 = inlined_call_operand.vmem [shape: f32[2,16], index: 0, kind: input, shape index: {}]
  %s1 = inlined_call_operand.vmem [shape: f32[32], index: 1, kind: output, shape index: {}]
  $region1: #{mul.8} parent=0
    #allocation0 [shape = 'u8[4096]{0}', space=vmem, size = 0x1000, scoped, tag = 'scoped mem for output reshape']
    #allocation1 [shape = 'u8[4096]{0}', space=vmem, size = 0x1000, scoped, tag = 'scoped mem for input reshape']
    %s3 = sshllo.u32 0, 2
    %v4 = vld [vmem:[%s0] sm:%s3]
    %5 = vst [vmem:[#allocation1] sm:%s3] %v4
    %v6 = vld [vmem:[#allocation1] sm:$0x1]
    %vm7 = vcmask 130048
    %8 = vst.msk [vmem:[#allocation0] sm:$0x1] %vm7, %v6
    %s9 = scalar_lea.vmem [#allocation1], 1
    %v10 = vld [vmem:[%s9] sm:$0x1]
    %11 = vrot.lane.b32.xlu0 %v10, 16
    %v12 = vpop.permute.xlu0 %11
    %vm13 = vcmask 261248
    %14 = vst.msk [vmem:[#allocation0] sm:$0x1] %vm13, %v12
    %s16 = sshllo.u32 0, 1
    %v18 = vld [vmem:[#allocation0] sm:%s16]
    %s19 = sshllo.u32 0, 1
    %20 = vst [vmem:[%s1] sm:%s19] %v18

// kernel: bert_cnn_forward.1
$region0: #{bert_cnn_forward.1}
  #allocation0 [shape = 'u32[]', space=smem, size = 0x4, offset = 0x4, fixed_abs, tag = 'smem constant byte address 0x4 - core index']
  #allocation1 [shape = 'u32[144,128]{1,0:T(1,128)}', space=vmem, size = 0x12000, scoped, tag = 'internal scratch']
  %s0 = inlined_call_operand.vmem [shape: f32[32,32], index: 0, kind: input, shape index: {}]
  %s1 = inlined_call_operand.vmem [shape: f32[32,32], index: 1, kind: input, shape index: {}]
  %s2 = inlined_call_operand.vmem [shape: f32[16,128], index: 2, kind: input, shape index: {}]
  %s3 = inlined_call_operand.vmem [shape: f32[32,256], index: 3, kind: input, shape index: {}]
  %s4 = inlined_call_operand.vmem [shape: f32[128,32], index: 4, kind: input, shape index: {}]
  %s5 = inlined_call_operand.vmem [shape: f32[160,24], index: 5, kind: input, shape index: {}]
  %s6 = inlined_call_operand.vmem [shape: f32[24,128], index: 6, kind: input, shape index: {}]
  %s7 = inlined_call_operand.hbm [shape: f32[2,128], index: 7, kind: output, shape index: {}]
  %s8 = sld [smem:[#allocation0]]
  $region38: #{bert_cnn_forward.1} parent=0
    _
  %s10 = ssub.s32 1, %s8
  %s11 = scalar_select 0, %s10, %s8
  $region1: #{bert_cnn_forward.1} parent=0
    #allocation2 [shape = 'u8[1024]{0}', space=vmem, size = 0x400, scoped, tag = 'output window, operand 0, single buffered']
    #allocation3 [shape = 's32[1]{0}', space=sflag, size = 0x4, scoped, tag = 'scoped memory for bert_cnn_forward.1']
    %12 = vsyncpa [#allocation3], 0
    // Predicated region
    $region2: #{bert_cnn_forward.1} parent=1 // pred_check
      _
    $region3: #{bert_cnn_forward.1} parent=1 // pred_check_branch
      %14 = sbr.rel (0) target = $region5
    $region4: #{bert_cnn_forward.1} parent=1 // pred_region
      _
    $region5: #{bert_cnn_forward.1} parent=1 // pred_fallthru
      _
    // Predicated region
    $region6: #{bert_cnn_forward.1} parent=1 // pred_check
      _
    $region7: #{bert_cnn_forward.1} parent=1 // pred_check_branch
      %16 = sbr.rel (0) target = $region9
    $region8: #{bert_cnn_forward.1} parent=1 // pred_region
      _
    $region9: #{bert_cnn_forward.1} parent=1 // pred_fallthru
      _
    // Predicated region
    $region10: #{bert_cnn_forward.1} parent=1 // pred_check
      _
    $region11: #{bert_cnn_forward.1} parent=1 // pred_check_branch
      %18 = sbr.rel (0) target = $region13
    $region12: #{bert_cnn_forward.1} parent=1 // pred_region
      _
    $region13: #{bert_cnn_forward.1} parent=1 // pred_fallthru
      _
    // Predicated region
    $region14: #{bert_cnn_forward.1} parent=1 // pred_check
      _
    $region15: #{bert_cnn_forward.1} parent=1 // pred_check_branch
      %20 = sbr.rel (0) target = $region17
    $region16: #{bert_cnn_forward.1} parent=1 // pred_region
      _
    $region17: #{bert_cnn_forward.1} parent=1 // pred_fallthru
      _
    // Predicated region
    $region18: #{bert_cnn_forward.1} parent=1 // pred_check
      _
    $region19: #{bert_cnn_forward.1} parent=1 // pred_check_branch
      %22 = sbr.rel (0) target = $region21
    $region20: #{bert_cnn_forward.1} parent=1 // pred_region
      _
    $region21: #{bert_cnn_forward.1} parent=1 // pred_fallthru
      _
    // Predicated region
    $region22: #{bert_cnn_forward.1} parent=1 // pred_check
      _
    $region23: #{bert_cnn_forward.1} parent=1 // pred_check_branch
      %24 = sbr.rel (0) target = $region25
    $region24: #{bert_cnn_forward.1} parent=1 // pred_region
      _
    $region25: #{bert_cnn_forward.1} parent=1 // pred_fallthru
      _
    // Predicated region
    $region26: #{bert_cnn_forward.1} parent=1 // pred_check
      _
    $region27: #{bert_cnn_forward.1} parent=1 // pred_check_branch
      %26 = sbr.rel (0) target = $region29
    $region28: #{bert_cnn_forward.1} parent=1 // pred_region
      _
    $region29: #{bert_cnn_forward.1} parent=1 // pred_fallthru
      _
    %v27 = vld [vmem:[%s0] sm:$0xff]
    %v28 = vld [vmem:[%s0 + $0x8] sm:$0xff]
    %v29 = vld [vmem:[%s0 + $0x10] sm:$0xff]
    %v30 = vld [vmem:[%s0 + $0x18] sm:$0xff]
    %v31 = vld [vmem:[%s2] sm:$0x1]
    %v32 = vld [vmem:[%s2 + $0x1] sm:$0x1]
    %vm33 = vcmask 261120
    %v34 = vsel %vm33, %v27, 0.0
    %35 = vadd.xlane.f32.xlu0 %v34
    %v36 = vpop.xlane.xlu0 %35
    %v37 = vsel %vm33, %v28, 0.0
    %38 = vadd.xlane.f32.xlu0 %v37
    %v39 = vpop.xlane.xlu0 %38
    %v40 = vsel %vm33, %v29, 0.0
    %41 = vadd.xlane.f32.xlu0 %v40
    %v42 = vpop.xlane.xlu0 %41
    %v43 = vsel %vm33, %v30, 0.0
    %44 = vadd.xlane.f32.xlu0 %v43
    %v45 = vpop.xlane.xlu0 %44
    %v46 = vrcp.pop 32.0
    %v47 = vmul.f32 %v36, %v46
    %v48 = vmul.f32 %v39, %v46
    %v49 = vmul.f32 %v42, %v46
    %v50 = vmul.f32 %v45, %v46
    %v51 = vsub.f32 %v27, %v47
    %v52 = vsub.f32 %v28, %v48
    %v53 = vsub.f32 %v29, %v49
    %v54 = vsub.f32 %v30, %v50
    %v55 = vmul.f32 %v51, %v51
    %v56 = vmul.f32 %v52, %v52
    %v57 = vmul.f32 %v53, %v53
    %v58 = vmul.f32 %v54, %v54
    %v59 = vsel %vm33, %v55, 0.0
    %60 = vadd.xlane.f32.xlu0 %v59
    %v61 = vpop.xlane.xlu0 %60
    %v62 = vsel %vm33, %v56, 0.0
    %63 = vadd.xlane.f32.xlu0 %v62
    %v64 = vpop.xlane.xlu0 %63
    %v65 = vsel %vm33, %v57, 0.0
    %66 = vadd.xlane.f32.xlu0 %v65
    %v67 = vpop.xlane.xlu0 %66
    %v68 = vsel %vm33, %v58, 0.0
    %69 = vadd.xlane.f32.xlu0 %v68
    %v70 = vpop.xlane.xlu0 %69
    %v71 = vmul.f32 %v61, %v46
    %v72 = vmul.f32 %v64, %v46
    %v73 = vmul.f32 %v67, %v46
    %v74 = vmul.f32 %v70, %v46
    %v75 = vadd.f32 %v71, 1e-12
    %v76 = vadd.f32 %v72, 1e-12
    %v77 = vadd.f32 %v73, 1e-12
    %v78 = vadd.f32 %v74, 1e-12
    %v79 = vrsqrt.pop %v75
    %v80 = vrsqrt.pop %v76
    %v81 = vrsqrt.pop %v77
    %v82 = vrsqrt.pop %v78
    %v83 = vmul.f32 %v51, %v79
    %v84 = vmul.f32 %v52, %v80
    %v85 = vmul.f32 %v53, %v81
    %v86 = vmul.f32 %v54, %v82
    %v87 = vlaneseq
    %v88 = vshrl.u32 %v87, 7
    %v89 = vsub.s32 0, %v88
    %v90 = vrot.slane %v31, %v89
    %v91 = vmul.f32 %v83, %v90
    %v92 = vmul.f32 %v84, %v90
    %v93 = vmul.f32 %v85, %v90
    %v94 = vmul.f32 %v86, %v90
    %v95 = vlaneseq
    %v96 = vshrl.u32 %v95, 7
    %v97 = vsub.s32 0, %v96
    %v98 = vrot.slane %v32, %v97
    %v99 = vadd.f32 %v91, %v98
    %v100 = vadd.f32 %v92, %v98
    %v101 = vadd.f32 %v93, %v98
    %v102 = vadd.f32 %v94, %v98
    %v103 = vld [vmem:[%s3] sm:$0xff]
    %v104 = vld [vmem:[%s3 + $0x10] sm:$0xff]
    %v105 = vld [vmem:[%s3 + $0x20] sm:$0xff]
    %v106 = vld [vmem:[%s3 + $0x30] sm:$0xff]
    %v107 = vld [vmem:[%s2 + $0x8] sm:$0x1]
    %v108 = vlaneseq
    %v109 = vshrl.u32 %v108, 7
    %v110 = vsub.s32 0, %v109
    %v111 = vrot.slane %v107, %v110
    %v113 = vsel %vm33, %v99, 0
    %v116 = vsel %vm33, %v100, 0
    %v119 = vsel %vm33, %v101, 0
    %v122 = vsel %vm33, %v102, 0
    %124 = vmatprep.subr.mxu0 0.0
    %125 = vmatpush1.msra.mxu0 %v103
    %126 = vmatprep.subr.mxu0 0.0
    %127 = vmatpush1.msra.mxu0 %v104
    %128 = vmatprep.subr.mxu0 0.0
    %129 = vmatpush1.msra.mxu0 %v105
    %130 = vmatprep.subr.mxu0 0.0
    %131 = vmatpush1.msra.mxu0 %v106
    %132 = vmatprep.subr.mxu0 0.0
    %133 = vmatpush1.msra.mxu0 0.0
    %134 = vmatprep.subr.mxu0 0.0
    %135 = vmatpush1.msra.mxu0 0.0
    %136 = vmatprep.subr.mxu0 0.0
    %137 = vmatpush1.msra.mxu0 0.0
    %138 = vmatprep.subr.mxu0 0.0
    %139 = vmatpush1.msra.mxu0 0.0
    %140 = vmatprep.subr.mxu0 0.0
    %141 = vmatpush1.msra.mxu0 0.0
    %142 = vmatprep.subr.mxu0 0.0
    %143 = vmatpush1.msra.mxu0 0.0
    %144 = vmatprep.subr.mxu0 0.0
    %145 = vmatpush1.msra.mxu0 0.0
    %146 = vmatprep.subr.mxu0 0.0
    %147 = vmatpush1.msra.mxu0 0.0
    %148 = vmatprep.subr.mxu0 0.0
    %149 = vmatpush1.msra.mxu0 0.0
    %150 = vmatprep.subr.mxu0 0.0
    %151 = vmatpush1.msra.mxu0 0.0
    %152 = vmatprep.subr.mxu0 0.0
    %153 = vmatpush1.msra.mxu0 0.0
    %154 = vmatprep.subr.mxu0 0.0
    %155 = vmatpush1.msra.mxu0 0.0
    %156 = vmatprep.subr.mxu0 0.0
    %157 = vmatpush1.msra.mxu0 0.0
    %158 = vmatprep.subr.mxu0 0.0
    %159 = vmatpush1.msra.mxu0 0.0
    %160 = vmatprep.subr.mxu0 0.0
    %161 = vmatpush1.msra.mxu0 0.0
    %162 = vmatprep.subr.mxu0 0.0
    %163 = vmatpush1.msra.mxu0 0.0
    %164 = vmatprep.subr.mxu0 0.0
    %165 = vmatpush1.msra.mxu0 0.0
    %166 = vmatprep.subr.mxu0 0.0
    %167 = vmatpush1.msra.mxu0 0.0
    %168 = vmatprep.subr.mxu0 0.0
    %169 = vmatpush1.msra.mxu0 0.0
    %170 = vmatprep.subr.mxu0 0.0
    %171 = vmatpush1.msra.mxu0 0.0
    %172 = vmatprep.subr.mxu0 0.0
    %173 = vmatpush1.msra.mxu0 0.0
    %174 = vmatprep.subr.mxu0 0.0
    %175 = vmatpush1.msra.mxu0 0.0
    %176 = vmatprep.subr.mxu0 0.0
    %177 = vmatpush1.msra.mxu0 0.0
    %178 = vmatprep.subr.mxu0 0.0
    %179 = vmatpush1.msra.mxu0 0.0
    %180 = vmatprep.subr.mxu0 0.0
    %181 = vmatpush1.msra.mxu0 0.0
    %182 = vmatprep.subr.mxu0 0.0
    %183 = vmatpush1.msra.mxu0 0.0
    %184 = vmatprep.subr.mxu0 0.0
    %185 = vmatpush1.msra.mxu0 0.0
    %186 = vmatprep.subr.mxu0 0.0
    %187 = vmatpush1.msra.mxu0 0.0
    %188 = vmatprep.mubr.f32.mxu0 0.0
    %189 = vmatmul.mubr.f32.gmra.mrb[0].mxu0 %v113
    %v190 = vpop.f32.mrb[0].mxu0
    %v191 = vadd.f32 %v111, %v190
    %v192 = vpop.f32.mrb[0].mxu0
    %193 = vmatprep.mubr.f32.mxu0 0.0
    %194 = vmatmul.mubr.f32.gmra.mrb[0].mxu0 %v116
    %v195 = vpop.f32.mrb[0].mxu0
    %v196 = vadd.f32 %v111, %v195
    %v197 = vpop.f32.mrb[0].mxu0
    %198 = vmatprep.mubr.f32.mxu0 0.0
    %199 = vmatmul.mubr.f32.gmra.mrb[0].mxu0 %v119
    %v200 = vpop.f32.mrb[0].mxu0
    %v201 = vadd.f32 %v111, %v200
    %v202 = vpop.f32.mrb[0].mxu0
    %203 = vmatprep.mubr.f32.mxu0 0.0
    %204 = vmatmul.mubr.f32.gmra.mrb[0].mxu0 %v122
    %v205 = vpop.f32.mrb[0].mxu0
    %v206 = vadd.f32 %v111, %v205
    %v207 = vpop.f32.mrb[0].mxu0
    %208 = vdwg.mxu0
    %213 = vrot.lane.b32.xlu0 %v191, 120
    %v214 = vpop.permute.xlu0 %213
    %215 = vrot.lane.b32.xlu0 %v196, 120
    %v216 = vpop.permute.xlu0 %215
    %217 = vrot.lane.b32.xlu0 %v201, 120
    %v218 = vpop.permute.xlu0 %217
    %219 = vrot.lane.b32.xlu0 %v206, 120
    %v220 = vpop.permute.xlu0 %219
    %221 = vrot.lane.b32.xlu0 %v191, 112
    %v222 = vpop.permute.xlu0 %221
    %223 = vrot.lane.b32.xlu0 %v196, 112
    %v224 = vpop.permute.xlu0 %223
    %225 = vrot.lane.b32.xlu0 %v201, 112
    %v226 = vpop.permute.xlu0 %225
    %227 = vrot.lane.b32.xlu0 %v206, 112
    %v228 = vpop.permute.xlu0 %227
    %229 = vrot.lane.b32.xlu0 %v191, 104
    %v230 = vpop.permute.xlu0 %229
    %231 = vrot.lane.b32.xlu0 %v196, 104
    %v232 = vpop.permute.xlu0 %231
    %233 = vrot.lane.b32.xlu0 %v201, 104
    %v234 = vpop.permute.xlu0 %233
    %235 = vrot.lane.b32.xlu0 %v206, 104
    %v236 = vpop.permute.xlu0 %235
    %237 = vrot.lane.b32.xlu0 %v191, 96
    %v238 = vpop.permute.xlu0 %237
    %239 = vrot.lane.b32.xlu0 %v196, 96
    %v240 = vpop.permute.xlu0 %239
    %241 = vrot.lane.b32.xlu0 %v201, 96
    %v242 = vpop.permute.xlu0 %241
    %243 = vrot.lane.b32.xlu0 %v206, 96
    %v244 = vpop.permute.xlu0 %243
    %vm245 = vcmask 64512
    %v246 = vsel %vm245, %v191, 0
    %v248 = vsel %vm245, %v196, 0
    %v250 = vsel %vm245, %v201, 0
    %v252 = vsel %vm245, %v206, 0
    %v254 = vsel %vm245, %v238, 0
    %v256 = vsel %vm245, %v240, 0
    %v258 = vsel %vm245, %v242, 0
    %v260 = vsel %vm245, %v244, 0
    %262 = vmatprep.subr.mxu0 0.0
    %263 = vmatpush1.xpose.msra.mxu0 %v254
    %264 = vmatprep.subr.mxu0 0.0
    %265 = vmatpush1.xpose.msra.mxu0 %v256
    %266 = vmatprep.subr.mxu0 0.0
    %267 = vmatpush1.xpose.msra.mxu0 %v258
    %268 = vmatprep.subr.mxu0 0.0
    %269 = vmatpush1.xpose.msra.mxu0 %v260
    %270 = vmatprep.subr.mxu0 0.0
    %271 = vmatpush1.xpose.msra.mxu0 0.0
    %272 = vmatprep.subr.mxu0 0.0
    %273 = vmatpush1.xpose.msra.mxu0 0.0
    %274 = vmatprep.subr.mxu0 0.0
    %275 = vmatpush1.xpose.msra.mxu0 0.0
    %276 = vmatprep.subr.mxu0 0.0
    %277 = vmatpush1.xpose.msra.mxu0 0.0
    %278 = vmatprep.subr.mxu0 0.0
    %279 = vmatpush1.xpose.msra.mxu0 0.0
    %280 = vmatprep.subr.mxu0 0.0
    %281 = vmatpush1.xpose.msra.mxu0 0.0
    %282 = vmatprep.subr.mxu0 0.0
    %283 = vmatpush1.xpose.msra.mxu0 0.0
    %284 = vmatprep.subr.mxu0 0.0
    %285 = vmatpush1.xpose.msra.mxu0 0.0
    %286 = vmatprep.subr.mxu0 0.0
    %287 = vmatpush1.xpose.msra.mxu0 0.0
    %288 = vmatprep.subr.mxu0 0.0
    %289 = vmatpush1.xpose.msra.mxu0 0.0
    %290 = vmatprep.subr.mxu0 0.0
    %291 = vmatpush1.xpose.msra.mxu0 0.0
    %292 = vmatprep.subr.mxu0 0.0
    %293 = vmatpush1.xpose.msra.mxu0 0.0
    %294 = vmatprep.subr.mxu0 0.0
    %295 = vmatpush1.xpose.msra.mxu0 0.0
    %296 = vmatprep.subr.mxu0 0.0
    %297 = vmatpush1.xpose.msra.mxu0 0.0
    %298 = vmatprep.subr.mxu0 0.0
    %299 = vmatpush1.xpose.msra.mxu0 0.0
    %300 = vmatprep.subr.mxu0 0.0
    %301 = vmatpush1.xpose.msra.mxu0 0.0
    %302 = vmatprep.subr.mxu0 0.0
    %303 = vmatpush1.xpose.msra.mxu0 0.0
    %304 = vmatprep.subr.mxu0 0.0
    %305 = vmatpush1.xpose.msra.mxu0 0.0
    %306 = vmatprep.subr.mxu0 0.0
    %307 = vmatpush1.xpose.msra.mxu0 0.0
    %308 = vmatprep.subr.mxu0 0.0
    %309 = vmatpush1.xpose.msra.mxu0 0.0
    %310 = vmatprep.subr.mxu0 0.0
    %311 = vmatpush1.xpose.msra.mxu0 0.0
    %312 = vmatprep.subr.mxu0 0.0
    %313 = vmatpush1.xpose.msra.mxu0 0.0
    %314 = vmatprep.subr.mxu0 0.0
    %315 = vmatpush1.xpose.msra.mxu0 0.0
    %316 = vmatprep.subr.mxu0 0.0
    %317 = vmatpush1.xpose.msra.mxu0 0.0
    %318 = vmatprep.subr.mxu0 0.0
    %319 = vmatpush1.xpose.msra.mxu0 0.0
    %320 = vmatprep.subr.mxu0 0.0
    %321 = vmatpush1.xpose.msra.mxu0 0.0
    %322 = vmatprep.subr.mxu0 0.0
    %323 = vmatpush1.xpose.msra.mxu0 0.0
    %324 = vmatprep.subr.mxu0 0.0
    %325 = vmatpush1.xpose.msra.mxu0 0.0
    %326 = vmatprep.mubr.f32.mxu0 0.0
    %327 = vmatmul.mubr.f32.gmra.mrb[0].mxu0 %v246
    %v328 = vpop.f32.mrb[0].mxu0
    %v329 = vadd.f32 0.0, %v328
    %v330 = vpop.f32.mrb[0].mxu0
    %331 = vmatprep.mubr.f32.mxu0 0.0
    %332 = vmatmul.mubr.f32.gmra.mrb[0].mxu0 %v248
    %v333 = vpop.f32.mrb[0].mxu0
    %v334 = vadd.f32 0.0, %v333
    %v335 = vpop.f32.mrb[0].mxu0
    %336 = vmatprep.mubr.f32.mxu0 0.0
    %337 = vmatmul.mubr.f32.gmra.mrb[0].mxu0 %v250
    %v338 = vpop.f32.mrb[0].mxu0
    %v339 = vadd.f32 0.0, %v338
    %v340 = vpop.f32.mrb[0].mxu0
    %341 = vmatprep.mubr.f32.mxu0 0.0
    %342 = vmatmul.mubr.f32.gmra.mrb[0].mxu0 %v252
    %v343 = vpop.f32.mrb[0].mxu0
    %v344 = vadd.f32 0.0, %v343
    %v345 = vpop.f32.mrb[0].mxu0
    %346 = vdwg.mxu0
    %347 = vrot.lane.b32.xlu0 %v214, 96
    %v348 = vpop.permute.xlu0 %347
    %349 = vrot.lane.b32.xlu0 %v216, 96
    %v350 = vpop.permute.xlu0 %349
    %351 = vrot.lane.b32.xlu0 %v218, 96
    %v352 = vpop.permute.xlu0 %351
    %353 = vrot.lane.b32.xlu0 %v220, 96
    %v354 = vpop.permute.xlu0 %353
    %v355 = vsel %vm245, %v214, 0
    %v357 = vsel %vm245, %v216, 0
    %v359 = vsel %vm245, %v218, 0
    %v361 = vsel %vm245, %v220, 0
    %v363 = vsel %vm245, %v348, 0
    %v365 = vsel %vm245, %v350, 0
    %v367 = vsel %vm245, %v352, 0
    %v369 = vsel %vm245, %v354, 0
    %371 = vmatprep.subr.mxu0 0.0
    %372 = vmatpush1.xpose.msra.mxu0 %v363
    %373 = vmatprep.subr.mxu0 0.0
    %374 = vmatpush1.xpose.msra.mxu0 %v365
    %375 = vmatprep.subr.mxu0 0.0
    %376 = vmatpush1.xpose.msra.mxu0 %v367
    %377 = vmatprep.subr.mxu0 0.0
    %378 = vmatpush1.xpose.msra.mxu0 %v369
    %379 = vmatprep.subr.mxu0 0.0
    %380 = vmatpush1.xpose.msra.mxu0 0.0
    %381 = vmatprep.subr.mxu0 0.0
    %382 = vmatpush1.xpose.msra.mxu0 0.0
    %383 = vmatprep.subr.mxu0 0.0
    %384 = vmatpush1.xpose.msra.mxu0 0.0
    %385 = vmatprep.subr.mxu0 0.0
    %386 = vmatpush1.xpose.msra.mxu0 0.0
    %387 = vmatprep.subr.mxu0 0.0
    %388 = vmatpush1.xpose.msra.mxu0 0.0
    %389 = vmatprep.subr.mxu0 0.0
    %390 = vmatpush1.xpose.msra.mxu0 0.0
    %391 = vmatprep.subr.mxu0 0.0
    %392 = vmatpush1.xpose.msra.mxu0 0.0
    %393 = vmatprep.subr.mxu0 0.0
    %394 = vmatpush1.xpose.msra.mxu0 0.0
    %395 = vmatprep.subr.mxu0 0.0
    %396 = vmatpush1.xpose.msra.mxu0 0.0
    %397 = vmatprep.subr.mxu0 0.0
    %398 = vmatpush1.xpose.msra.mxu0 0.0
    %399 = vmatprep.subr.mxu0 0.0
    %400 = vmatpush1.xpose.msra.mxu0 0.0
    %401 = vmatprep.subr.mxu0 0.0
    %402 = vmatpush1.xpose.msra.mxu0 0.0
    %403 = vmatprep.subr.mxu0 0.0
    %404 = vmatpush1.xpose.msra.mxu0 0.0
    %405 = vmatprep.subr.mxu0 0.0
    %406 = vmatpush1.xpose.msra.mxu0 0.0
    %407 = vmatprep.subr.mxu0 0.0
    %408 = vmatpush1.xpose.msra.mxu0 0.0
    %409 = vmatprep.subr.mxu0 0.0
    %410 = vmatpush1.xpose.msra.mxu0 0.0
    %411 = vmatprep.subr.mxu0 0.0
    %412 = vmatpush1.xpose.msra.mxu0 0.0
    %413 = vmatprep.subr.mxu0 0.0
    %414 = vmatpush1.xpose.msra.mxu0 0.0
    %415 = vmatprep.subr.mxu0 0.0
    %416 = vmatpush1.xpose.msra.mxu0 0.0
    %417 = vmatprep.subr.mxu0 0.0
    %418 = vmatpush1.xpose.msra.mxu0 0.0
    %419 = vmatprep.subr.mxu0 0.0
    %420 = vmatpush1.xpose.msra.mxu0 0.0
    %421 = vmatprep.subr.mxu0 0.0
    %422 = vmatpush1.xpose.msra.mxu0 0.0
    %423 = vmatprep.subr.mxu0 0.0
    %424 = vmatpush1.xpose.msra.mxu0 0.0
    %425 = vmatprep.subr.mxu0 0.0
    %426 = vmatpush1.xpose.msra.mxu0 0.0
    %427 = vmatprep.subr.mxu0 0.0
    %428 = vmatpush1.xpose.msra.mxu0 0.0
    %429 = vmatprep.subr.mxu0 0.0
    %430 = vmatpush1.xpose.msra.mxu0 0.0
    %431 = vmatprep.subr.mxu0 0.0
    %432 = vmatpush1.xpose.msra.mxu0 0.0
    %433 = vmatprep.subr.mxu0 0.0
    %434 = vmatpush1.xpose.msra.mxu0 0.0
    %435 = vmatprep.mubr.f32.mxu0 0.0
    %436 = vmatmul.mubr.f32.gmra.mrb[0].mxu0 %v355
    %v437 = vpop.f32.mrb[0].mxu0
    %v438 = vadd.f32 0.0, %v437
    %v439 = vpop.f32.mrb[0].mxu0
    %440 = vmatprep.mubr.f32.mxu0 0.0
    %441 = vmatmul.mubr.f32.gmra.mrb[0].mxu0 %v357
    %v442 = vpop.f32.mrb[0].mxu0
    %v443 = vadd.f32 0.0, %v442
    %v444 = vpop.f32.mrb[0].mxu0
    %445 = vmatprep.mubr.f32.mxu0 0.0
    %446 = vmatmul.mubr.f32.gmra.mrb[0].mxu0 %v359
    %v447 = vpop.f32.mrb[0].mxu0
    %v448 = vadd.f32 0.0, %v447
    %v449 = vpop.f32.mrb[0].mxu0
    %450 = vmatprep.mubr.f32.mxu0 0.0
    %451 = vmatmul.mubr.f32.gmra.mrb[0].mxu0 %v361
    %v452 = vpop.f32.mrb[0].mxu0
    %v453 = vadd.f32 0.0, %v452
    %v454 = vpop.f32.mrb[0].mxu0
    %455 = vdwg.mxu0
    %456 = vrot.lane.b32.xlu0 %v222, 96
    %v457 = vpop.permute.xlu0 %456
    %458 = vrot.lane.b32.xlu0 %v224, 96
    %v459 = vpop.permute.xlu0 %458
    %460 = vrot.lane.b32.xlu0 %v226, 96
    %v461 = vpop.permute.xlu0 %460
    %462 = vrot.lane.b32.xlu0 %v228, 96
    %v463 = vpop.permute.xlu0 %462
    %v464 = vsel %vm245, %v222, 0
    %v466 = vsel %vm245, %v224, 0
    %v468 = vsel %vm245, %v226, 0
    %v470 = vsel %vm245, %v228, 0
    %v472 = vsel %vm245, %v457, 0
    %v474 = vsel %vm245, %v459, 0
    %v476 = vsel %vm245, %v461, 0
    %v478 = vsel %vm245, %v463, 0
    %480 = vmatprep.subr.mxu0 0.0
    %481 = vmatpush1.xpose.msra.mxu0 %v472
    %482 = vmatprep.subr.mxu0 0.0
    %483 = vmatpush1.xpose.msra.mxu0 %v474
    %484 = vmatprep.subr.mxu0 0.0
    %485 = vmatpush1.xpose.msra.mxu0 %v476
    %486 = vmatprep.subr.mxu0 0.0
    %487 = vmatpush1.xpose.msra.mxu0 %v478
    %488 = vmatprep.subr.mxu0 0.0
    %489 = vmatpush1.xpose.msra.mxu0 0.0
    %490 = vmatprep.subr.mxu0 0.0
    %491 = vmatpush1.xpose.msra.mxu0 0.0
    %492 = vmatprep.subr.mxu0 0.0
    %493 = vmatpush1.xpose.msra.mxu0 0.0
    %494 = vmatprep.subr.mxu0 0.0
    %495 = vmatpush1.xpose.msra.mxu0 0.0
    %496 = vmatprep.subr.mxu0 0.0
    %497 = vmatpush1.xpose.msra.mxu0 0.0
    %498 = vmatprep.subr.mxu0 0.0
    %499 = vmatpush1.xpose.msra.mxu0 0.0
    %500 = vmatprep.subr.mxu0 0.0
    %501 = vmatpush1.xpose.msra.mxu0 0.0
    %502 = vmatprep.subr.mxu0 0.0
    %503 = vmatpush1.xpose.msra.mxu0 0.0
    %504 = vmatprep.subr.mxu0 0.0
    %505 = vmatpush1.xpose.msra.mxu0 0.0
    %506 = vmatprep.subr.mxu0 0.0
    %507 = vmatpush1.xpose.msra.mxu0 0.0
    %508 = vmatprep.subr.mxu0 0.0
    %509 = vmatpush1.xpose.msra.mxu0 0.0
    %510 = vmatprep.subr.mxu0 0.0
    %511 = vmatpush1.xpose.msra.mxu0 0.0
    %512 = vmatprep.subr.mxu0 0.0
    %513 = vmatpush1.xpose.msra.mxu0 0.0
    %514 = vmatprep.subr.mxu0 0.0
    %515 = vmatpush1.xpose.msra.mxu0 0.0
    %516 = vmatprep.subr.mxu0 0.0
    %517 = vmatpush1.xpose.msra.mxu0 0.0
    %518 = vmatprep.subr.mxu0 0.0
    %519 = vmatpush1.xpose.msra.mxu0 0.0
    %520 = vmatprep.subr.mxu0 0.0
    %521 = vmatpush1.xpose.msra.mxu0 0.0
    %522 = vmatprep.subr.mxu0 0.0
    %523 = vmatpush1.xpose.msra.mxu0 0.0
    %524 = vmatprep.subr.mxu0 0.0
    %525 = vmatpush1.xpose.msra.mxu0 0.0
    %526 = vmatprep.subr.mxu0 0.0
    %527 = vmatpush1.xpose.msra.mxu0 0.0
    %528 = vmatprep.subr.mxu0 0.0
    %529 = vmatpush1.xpose.msra.mxu0 0.0
    %530 = vmatprep.subr.mxu0 0.0
    %531 = vmatpush1.xpose.msra.mxu0 0.0
    %532 = vmatprep.subr.mxu0 0.0
    %533 = vmatpush1.xpose.msra.mxu0 0.0
    %534 = vmatprep.subr.mxu0 0.0
    %535 = vmatpush1.xpose.msra.mxu0 0.0
    %536 = vmatprep.subr.mxu0 0.0
    %537 = vmatpush1.xpose.msra.mxu0 0.0
    %538 = vmatprep.subr.mxu0 0.0
    %539 = vmatpush1.xpose.msra.mxu0 0.0
    %540 = vmatprep.subr.mxu0 0.0
    %541 = vmatpush1.xpose.msra.mxu0 0.0
    %542 = vmatprep.subr.mxu0 0.0
    %543 = vmatpush1.xpose.msra.mxu0 0.0
    %544 = vmatprep.mubr.f32.mxu0 0.0
    %545 = vmatmul.mubr.f32.gmra.mrb[0].mxu0 %v464
    %v546 = vpop.f32.mrb[0].mxu0
    %v547 = vadd.f32 0.0, %v546
    %v548 = vpop.f32.mrb[0].mxu0
    %549 = vmatprep.mubr.f32.mxu0 0.0
    %550 = vmatmul.mubr.f32.gmra.mrb[0].mxu0 %v466
    %v551 = vpop.f32.mrb[0].mxu0
    %v552 = vadd.f32 0.0, %v551
    %v553 = vpop.f32.mrb[0].mxu0
    %554 = vmatprep.mubr.f32.mxu0 0.0
    %555 = vmatmul.mubr.f32.gmra.mrb[0].mxu0 %v468
    %v556 = vpop.f32.mrb[0].mxu0
    %v557 = vadd.f32 0.0, %v556
    %v558 = vpop.f32.mrb[0].mxu0
    %559 = vmatprep.mubr.f32.mxu0 0.0
    %560 = vmatmul.mubr.f32.gmra.mrb[0].mxu0 %v470
    %v561 = vpop.f32.mrb[0].mxu0
    %v562 = vadd.f32 0.0, %v561
    %v563 = vpop.f32.mrb[0].mxu0
    %564 = vdwg.mxu0
    %565 = vrot.lane.b32.xlu0 %v230, 96
    %v566 = vpop.permute.xlu0 %565
    %567 = vrot.lane.b32.xlu0 %v232, 96
    %v568 = vpop.permute.xlu0 %567
    %569 = vrot.lane.b32.xlu0 %v234, 96
    %v570 = vpop.permute.xlu0 %569
    %571 = vrot.lane.b32.xlu0 %v236, 96
    %v572 = vpop.permute.xlu0 %571
    %v573 = vsel %vm245, %v230, 0
    %v575 = vsel %vm245, %v232, 0
    %v577 = vsel %vm245, %v234, 0
    %v579 = vsel %vm245, %v236, 0
    %v581 = vsel %vm245, %v566, 0
    %v583 = vsel %vm245, %v568, 0
    %v585 = vsel %vm245, %v570, 0
    %v587 = vsel %vm245, %v572, 0
    %589 = vmatprep.subr.mxu0 0.0
    %590 = vmatpush1.xpose.msra.mxu0 %v581
    %591 = vmatprep.subr.mxu0 0.0
    %592 = vmatpush1.xpose.msra.mxu0 %v583
    %593 = vmatprep.subr.mxu0 0.0
    %594 = vmatpush1.xpose.msra.mxu0 %v585
    %595 = vmatprep.subr.mxu0 0.0
    %596 = vmatpush1.xpose.msra.mxu0 %v587
    %597 = vmatprep.subr.mxu0 0.0
    %598 = vmatpush1.xpose.msra.mxu0 0.0
    %599 = vmatprep.subr.mxu0 0.0
    %600 = vmatpush1.xpose.msra.mxu0 0.0
    %601 = vmatprep.subr.mxu0 0.0
    %602 = vmatpush1.xpose.msra.mxu0 0.0
    %603 = vmatprep.subr.mxu0 0.0
    %604 = vmatpush1.xpose.msra.mxu0 0.0
    %605 = vmatprep.subr.mxu0 0.0
    %606 = vmatpush1.xpose.msra.mxu0 0.0
    %607 = vmatprep.subr.mxu0 0.0
    %608 = vmatpush1.xpose.msra.mxu0 0.0
    %609 = vmatprep.subr.mxu0 0.0
    %610 = vmatpush1.xpose.msra.mxu0 0.0
    %611 = vmatprep.subr.mxu0 0.0
    %612 = vmatpush1.xpose.msra.mxu0 0.0
    %613 = vmatprep.subr.mxu0 0.0
    %614 = vmatpush1.xpose.msra.mxu0 0.0
    %615 = vmatprep.subr.mxu0 0.0
    %616 = vmatpush1.xpose.msra.mxu0 0.0
    %617 = vmatprep.subr.mxu0 0.0
    %618 = vmatpush1.xpose.msra.mxu0 0.0
    %619 = vmatprep.subr.mxu0 0.0
    %620 = vmatpush1.xpose.msra.mxu0 0.0
    %621 = vmatprep.subr.mxu0 0.0
    %622 = vmatpush1.xpose.msra.mxu0 0.0
    %623 = vmatprep.subr.mxu0 0.0
    %624 = vmatpush1.xpose.msra.mxu0 0.0
    %625 = vmatprep.subr.mxu0 0.0
    %626 = vmatpush1.xpose.msra.mxu0 0.0
    %627 = vmatprep.subr.mxu0 0.0
    %628 = vmatpush1.xpose.msra.mxu0 0.0
    %629 = vmatprep.subr.mxu0 0.0
    %630 = vmatpush1.xpose.msra.mxu0 0.0
    %631 = vmatprep.subr.mxu0 0.0
    %632 = vmatpush1.xpose.msra.mxu0 0.0
    %633 = vmatprep.subr.mxu0 0.0
    %634 = vmatpush1.xpose.msra.mxu0 0.0
    %635 = vmatprep.subr.mxu0 0.0
    %636 = vmatpush1.xpose.msra.mxu0 0.0
    %637 = vmatprep.subr.mxu0 0.0
    %638 = vmatpush1.xpose.msra.mxu0 0.0
    %639 = vmatprep.subr.mxu0 0.0
    %640 = vmatpush1.xpose.msra.mxu0 0.0
    %641 = vmatprep.subr.mxu0 0.0
    %642 = vmatpush1.xpose.msra.mxu0 0.0
    %643 = vmatprep.subr.mxu0 0.0
    %644 = vmatpush1.xpose.msra.mxu0 0.0
    %645 = vmatprep.subr.mxu0 0.0
    %646 = vmatpush1.xpose.msra.mxu0 0.0
    %647 = vmatprep.subr.mxu0 0.0
    %648 = vmatpush1.xpose.msra.mxu0 0.0
    %649 = vmatprep.subr.mxu0 0.0
    %650 = vmatpush1.xpose.msra.mxu0 0.0
    %651 = vmatprep.subr.mxu0 0.0
    %652 = vmatpush1.xpose.msra.mxu0 0.0
    %653 = vmatprep.mubr.f32.mxu0 0.0
    %654 = vmatmul.mubr.f32.gmra.mrb[0].mxu0 %v573
    %v655 = vpop.f32.mrb[0].mxu0
    %v656 = vadd.f32 0.0, %v655
    %v657 = vpop.f32.mrb[0].mxu0
    %658 = vmatprep.mubr.f32.mxu0 0.0
    %659 = vmatmul.mubr.f32.gmra.mrb[0].mxu0 %v575
    %v660 = vpop.f32.mrb[0].mxu0
    %v661 = vadd.f32 0.0, %v660
    %v662 = vpop.f32.mrb[0].mxu0
    %663 = vmatprep.mubr.f32.mxu0 0.0
    %664 = vmatmul.mubr.f32.gmra.mrb[0].mxu0 %v577
    %v665 = vpop.f32.mrb[0].mxu0
    %v666 = vadd.f32 0.0, %v665
    %v667 = vpop.f32.mrb[0].mxu0
    %668 = vmatprep.mubr.f32.mxu0 0.0
    %669 = vmatmul.mubr.f32.gmra.mrb[0].mxu0 %v579
    %v670 = vpop.f32.mrb[0].mxu0
    %v671 = vadd.f32 0.0, %v670
    %v672 = vpop.f32.mrb[0].mxu0
    %673 = vdwg.mxu0
    %v674 = vmul.f32 %v329, 0.35355338
    %v675 = vmul.f32 %v334, 0.35355338
    %v676 = vmul.f32 %v339, 0.35355338
    %v677 = vmul.f32 %v344, 0.35355338
    %v678 = vmul.f32 %v438, 0.35355338
    %v679 = vmul.f32 %v443, 0.35355338
    %v680 = vmul.f32 %v448, 0.35355338
    %v681 = vmul.f32 %v453, 0.35355338
    %v682 = vmul.f32 %v547, 0.35355338
    %v683 = vmul.f32 %v552, 0.35355338
    %v684 = vmul.f32 %v557, 0.35355338
    %v685 = vmul.f32 %v562, 0.35355338
    %v686 = vmul.f32 %v656, 0.35355338
    %v687 = vmul.f32 %v661, 0.35355338
    %v688 = vmul.f32 %v666, 0.35355338
    %v689 = vmul.f32 %v671, 0.35355338
    %v690 = vld [vmem:[%s1] sm:$0xff]
    %v691 = vld [vmem:[%s1 + $0x8] sm:$0xff]
    %v692 = vld [vmem:[%s1 + $0x10] sm:$0xff]
    %v693 = vld [vmem:[%s1 + $0x18] sm:$0xff]
    %v694 = vadd.f32 %v674, %v690
    %v695 = vadd.f32 %v675, %v691
    %v696 = vadd.f32 %v676, %v692
    %v697 = vadd.f32 %v677, %v693
    %v698 = vadd.f32 %v678, %v690
    %v699 = vadd.f32 %v679, %v691
    %v700 = vadd.f32 %v680, %v692
    %v701 = vadd.f32 %v681, %v693
    %v702 = vadd.f32 %v682, %v690
    %v703 = vadd.f32 %v683, %v691
    %v704 = vadd.f32 %v684, %v692
    %v705 = vadd.f32 %v685, %v693
    %v706 = vadd.f32 %v686, %v690
    %v707 = vadd.f32 %v687, %v691
    %v708 = vadd.f32 %v688, %v692
    %v709 = vadd.f32 %v689, %v693
    %v710 = vsel %vm33, %v694, -inf
    %711 = vmax.xlane.f32.xlu0 %v710
    %v712 = vpop.xlane.xlu0 %711
    %v713 = vsel %vm33, %v695, -inf
    %714 = vmax.xlane.f32.xlu0 %v713
    %v715 = vpop.xlane.xlu0 %714
    %v716 = vsel %vm33, %v696, -inf
    %717 = vmax.xlane.f32.xlu0 %v716
    %v718 = vpop.xlane.xlu0 %717
    %v719 = vsel %vm33, %v697, -inf
    %720 = vmax.xlane.f32.xlu0 %v719
    %v721 = vpop.xlane.xlu0 %720
    %v722 = vsel %vm33, %v698, -inf
    %723 = vmax.xlane.f32.xlu0 %v722
    %v724 = vpop.xlane.xlu0 %723
    %v725 = vsel %vm33, %v699, -inf
    %726 = vmax.xlane.f32.xlu0 %v725
    %v727 = vpop.xlane.xlu0 %726
    %v728 = vsel %vm33, %v700, -inf
    %729 = vmax.xlane.f32.xlu0 %v728
    %v730 = vpop.xlane.xlu0 %729
    %v731 = vsel %vm33, %v701, -inf
    %732 = vmax.xlane.f32.xlu0 %v731
    %v733 = vpop.xlane.xlu0 %732
    %v734 = vsel %vm33, %v702, -inf
    %735 = vmax.xlane.f32.xlu0 %v734
    %v736 = vpop.xlane.xlu0 %735
    %v737 = vsel %vm33, %v703, -inf
    %738 = vmax.xlane.f32.xlu0 %v737
    %v739 = vpop.xlane.xlu0 %738
    %v740 = vsel %vm33, %v704, -inf
    %741 = vmax.xlane.f32.xlu0 %v740
    %v742 = vpop.xlane.xlu0 %741
    %v743 = vsel %vm33, %v705, -inf
    %744 = vmax.xlane.f32.xlu0 %v743
    %v745 = vpop.xlane.xlu0 %744
    %v746 = vsel %vm33, %v706, -inf
    %747 = vmax.xlane.f32.xlu0 %v746
    %v748 = vpop.xlane.xlu0 %747
    %v749 = vsel %vm33, %v707, -inf
    %750 = vmax.xlane.f32.xlu0 %v749
    %v751 = vpop.xlane.xlu0 %750
    %v752 = vsel %vm33, %v708, -inf
    %753 = vmax.xlane.f32.xlu0 %v752
    %v754 = vpop.xlane.xlu0 %753
    %v755 = vsel %vm33, %v709, -inf
    %756 = vmax.xlane.f32.xlu0 %v755
    %v757 = vpop.xlane.xlu0 %756
    %v758 = vsub.f32 %v694, %v712
    %v759 = vsub.f32 %v695, %v715
    %v760 = vsub.f32 %v696, %v718
    %v761 = vsub.f32 %v697, %v721
    %v762 = vsub.f32 %v698, %v724
    %v763 = vsub.f32 %v699, %v727
    %v764 = vsub.f32 %v700, %v730
    %v765 = vsub.f32 %v701, %v733
    %v766 = vsub.f32 %v702, %v736
    %v767 = vsub.f32 %v703, %v739
    %v768 = vsub.f32 %v704, %v742
    %v769 = vsub.f32 %v705, %v745
    %v770 = vsub.f32 %v706, %v748
    %v771 = vsub.f32 %v707, %v751
    %v772 = vsub.f32 %v708, %v754
    %v773 = vsub.f32 %v709, %v757
    %v774 = vmul.f32 %v758, 1.442695
    %v775 = vpow.pop %v774
    %v776 = vmul.f32 %v759, 1.442695
    %v777 = vpow.pop %v776
    %v778 = vmul.f32 %v760, 1.442695
    %v779 = vpow.pop %v778
    %v780 = vmul.f32 %v761, 1.442695
    %v781 = vpow.pop %v780
    %v782 = vmul.f32 %v762, 1.442695
    %v783 = vpow.pop %v782
    %v784 = vmul.f32 %v763, 1.442695
    %v785 = vpow.pop %v784
    %v786 = vmul.f32 %v764, 1.442695
    %v787 = vpow.pop %v786
    %v788 = vmul.f32 %v765, 1.442695
    %v789 = vpow.pop %v788
    %v790 = vmul.f32 %v766, 1.442695
    %v791 = vpow.pop %v790
    %v792 = vmul.f32 %v767, 1.442695
    %v793 = vpow.pop %v792
    %v794 = vmul.f32 %v768, 1.442695
    %v795 = vpow.pop %v794
    %v796 = vmul.f32 %v769, 1.442695
    %v797 = vpow.pop %v796
    %v798 = vmul.f32 %v770, 1.442695
    %v799 = vpow.pop %v798
    %v800 = vmul.f32 %v771, 1.442695
    %v801 = vpow.pop %v800
    %v802 = vmul.f32 %v772, 1.442695
    %v803 = vpow.pop %v802
    %v804 = vmul.f32 %v773, 1.442695
    %v805 = vpow.pop %v804
    %v806 = vsel %vm33, %v775, 0.0
    %807 = vadd.xlane.f32.xlu0 %v806
    %v808 = vpop.xlane.xlu0 %807
    %v809 = vsel %vm33, %v777, 0.0
    %810 = vadd.xlane.f32.xlu0 %v809
    %v811 = vpop.xlane.xlu0 %810
    %v812 = vsel %vm33, %v779, 0.0
    %813 = vadd.xlane.f32.xlu0 %v812
    %v814 = vpop.xlane.xlu0 %813
    %v815 = vsel %vm33, %v781, 0.0
    %816 = vadd.xlane.f32.xlu0 %v815
    %v817 = vpop.xlane.xlu0 %816
    %v818 = vsel %vm33, %v783, 0.0
    %819 = vadd.xlane.f32.xlu0 %v818
    %v820 = vpop.xlane.xlu0 %819
    %v821 = vsel %vm33, %v785, 0.0
    %822 = vadd.xlane.f32.xlu0 %v821
    %v823 = vpop.xlane.xlu0 %822
    %v824 = vsel %vm33, %v787, 0.0
    %825 = vadd.xlane.f32.xlu0 %v824
    %v826 = vpop.xlane.xlu0 %825
    %v827 = vsel %vm33, %v789, 0.0
    %828 = vadd.xlane.f32.xlu0 %v827
    %v829 = vpop.xlane.xlu0 %828
    %v830 = vsel %vm33, %v791, 0.0
    %831 = vadd.xlane.f32.xlu0 %v830
    %v832 = vpop.xlane.xlu0 %831
    %v833 = vsel %vm33, %v793, 0.0
    %834 = vadd.xlane.f32.xlu0 %v833
    %v835 = vpop.xlane.xlu0 %834
    %v836 = vsel %vm33, %v795, 0.0
    %837 = vadd.xlane.f32.xlu0 %v836
    %v838 = vpop.xlane.xlu0 %837
    %v839 = vsel %vm33, %v797, 0.0
    %840 = vadd.xlane.f32.xlu0 %v839
    %v841 = vpop.xlane.xlu0 %840
    %v842 = vsel %vm33, %v799, 0.0
    %843 = vadd.xlane.f32.xlu0 %v842
    %v844 = vpop.xlane.xlu0 %843
    %v845 = vsel %vm33, %v801, 0.0
    %846 = vadd.xlane.f32.xlu0 %v845
    %v847 = vpop.xlane.xlu0 %846
    %v848 = vsel %vm33, %v803, 0.0
    %849 = vadd.xlane.f32.xlu0 %v848
    %v850 = vpop.xlane.xlu0 %849
    %v851 = vsel %vm33, %v805, 0.0
    %852 = vadd.xlane.f32.xlu0 %v851
    %v853 = vpop.xlane.xlu0 %852
    %v854 = vrcp.pop %v808
    %v855 = vrcp.pop %v811
    %v856 = vrcp.pop %v814
    %v857 = vrcp.pop %v817
    %v858 = vrcp.pop %v820
    %v859 = vrcp.pop %v823
    %v860 = vrcp.pop %v826
    %v861 = vrcp.pop %v829
    %v862 = vrcp.pop %v832
    %v863 = vrcp.pop %v835
    %v864 = vrcp.pop %v838
    %v865 = vrcp.pop %v841
    %v866 = vrcp.pop %v844
    %v867 = vrcp.pop %v847
    %v868 = vrcp.pop %v850
    %v869 = vrcp.pop %v853
    %v870 = vmul.f32 %v775, %v854
    %v871 = vmul.f32 %v777, %v855
    %v872 = vmul.f32 %v779, %v856
    %v873 = vmul.f32 %v781, %v857
    %v874 = vmul.f32 %v783, %v858
    %v875 = vmul.f32 %v785, %v859
    %v876 = vmul.f32 %v787, %v860
    %v877 = vmul.f32 %v789, %v861
    %v878 = vmul.f32 %v791, %v862
    %v879 = vmul.f32 %v793, %v863
    %v880 = vmul.f32 %v795, %v864
    %v881 = vmul.f32 %v797, %v865
    %v882 = vmul.f32 %v799, %v866
    %v883 = vmul.f32 %v801, %v867
    %v884 = vmul.f32 %v803, %v868
    %v885 = vmul.f32 %v805, %v869
    %886 = vrot.lane.b32.xlu0 %v191, 64
    %v887 = vpop.permute.xlu0 %886
    %888 = vrot.lane.b32.xlu0 %v196, 64
    %v889 = vpop.permute.xlu0 %888
    %890 = vrot.lane.b32.xlu0 %v201, 64
    %v891 = vpop.permute.xlu0 %890
    %892 = vrot.lane.b32.xlu0 %v206, 64
    %v893 = vpop.permute.xlu0 %892
    %v899 = vsel %vm33, %v870, 0
    %v902 = vsel %vm33, %v871, 0
    %v905 = vsel %vm33, %v872, 0
    %v908 = vsel %vm33, %v873, 0
    %910 = vmatprep.subr.mxu0 0.0
    %911 = vmatpush1.msra.mxu0 %v887
    %912 = vmatprep.subr.mxu0 0.0
    %913 = vmatpush1.msra.mxu0 %v889
    %914 = vmatprep.subr.mxu0 0.0
    %915 = vmatpush1.msra.mxu0 %v891
    %916 = vmatprep.subr.mxu0 0.0
    %917 = vmatpush1.msra.mxu0 %v893
    %918 = vmatprep.subr.mxu0 0.0
    %919 = vmatpush1.msra.mxu0 0.0
    %920 = vmatprep.subr.mxu0 0.0
    %921 = vmatpush1.msra.mxu0 0.0
    %922 = vmatprep.subr.mxu0 0.0
    %923 = vmatpush1.msra.mxu0 0.0
    %924 = vmatprep.subr.mxu0 0.0
    %925 = vmatpush1.msra.mxu0 0.0
    %926 = vmatprep.subr.mxu0 0.0
    %927 = vmatpush1.msra.mxu0 0.0
    %928 = vmatprep.subr.mxu0 0.0
    %929 = vmatpush1.msra.mxu0 0.0
    %930 = vmatprep.subr.mxu0 0.0
    %931 = vmatpush1.msra.mxu0 0.0
    %932 = vmatprep.subr.mxu0 0.0
    %933 = vmatpush1.msra.mxu0 0.0
    %934 = vmatprep.subr.mxu0 0.0
    %935 = vmatpush1.msra.mxu0 0.0
    %936 = vmatprep.subr.mxu0 0.0
    %937 = vmatpush1.msra.mxu0 0.0
    %938 = vmatprep.subr.mxu0 0.0
    %939 = vmatpush1.msra.mxu0 0.0
    %940 = vmatprep.subr.mxu0 0.0
    %941 = vmatpush1.msra.mxu0 0.0
    %942 = vmatprep.subr.mxu0 0.0
    %943 = vmatpush1.msra.mxu0 0.0
    %944 = vmatprep.subr.mxu0 0.0
    %945 = vmatpush1.msra.mxu0 0.0
    %946 = vmatprep.subr.mxu0 0.0
    %947 = vmatpush1.msra.mxu0 0.0
    %948 = vmatprep.subr.mxu0 0.0
    %949 = vmatpush1.msra.mxu0 0.0
    %950 = vmatprep.subr.mxu0 0.0
    %951 = vmatpush1.msra.mxu0 0.0
    %952 = vmatprep.subr.mxu0 0.0
    %953 = vmatpush1.msra.mxu0 0.0
    %954 = vmatprep.subr.mxu0 0.0
    %955 = vmatpush1.msra.mxu0 0.0
    %956 = vmatprep.subr.mxu0 0.0
    %957 = vmatpush1.msra.mxu0 0.0
    %958 = vmatprep.subr.mxu0 0.0
    %959 = vmatpush1.msra.mxu0 0.0
    %960 = vmatprep.subr.mxu0 0.0
    %961 = vmatpush1.msra.mxu0 0.0
    %962 = vmatprep.subr.mxu0 0.0
    %963 = vmatpush1.msra.mxu0 0.0
    %964 = vmatprep.subr.mxu0 0.0
    %965 = vmatpush1.msra.mxu0 0.0
    %966 = vmatprep.subr.mxu0 0.0
    %967 = vmatpush1.msra.mxu0 0.0
    %968 = vmatprep.subr.mxu0 0.0
    %969 = vmatpush1.msra.mxu0 0.0
    %970 = vmatprep.subr.mxu0 0.0
    %971 = vmatpush1.msra.mxu0 0.0
    %972 = vmatprep.subr.mxu0 0.0
    %973 = vmatpush1.msra.mxu0 0.0
    %974 = vmatprep.mubr.f32.mxu0 0.0
    %975 = vmatmul.mubr.f32.gmra.mrb[0].mxu0 %v899
    %v976 = vpop.f32.mrb[0].mxu0
    %v977 = vadd.f32 0.0, %v976
    %v978 = vpop.f32.mrb[0].mxu0
    %979 = vmatprep.mubr.f32.mxu0 0.0
    %980 = vmatmul.mubr.f32.gmra.mrb[0].mxu0 %v902
    %v981 = vpop.f32.mrb[0].mxu0
    %v982 = vadd.f32 0.0, %v981
    %v983 = vpop.f32.mrb[0].mxu0
    %984 = vmatprep.mubr.f32.mxu0 0.0
    %985 = vmatmul.mubr.f32.gmra.mrb[0].mxu0 %v905
    %v986 = vpop.f32.mrb[0].mxu0
    %v987 = vadd.f32 0.0, %v986
    %v988 = vpop.f32.mrb[0].mxu0
    %989 = vmatprep.mubr.f32.mxu0 0.0
    %990 = vmatmul.mubr.f32.gmra.mrb[0].mxu0 %v908
    %v991 = vpop.f32.mrb[0].mxu0
    %v992 = vadd.f32 0.0, %v991
    %v993 = vpop.f32.mrb[0].mxu0
    %994 = vdwg.mxu0
    %995 = vrot.lane.b32.xlu0 %v214, 64
    %v996 = vpop.permute.xlu0 %995
    %997 = vrot.lane.b32.xlu0 %v216, 64
    %v998 = vpop.permute.xlu0 %997
    %999 = vrot.lane.b32.xlu0 %v218, 64
    %v1000 = vpop.permute.xlu0 %999
    %1001 = vrot.lane.b32.xlu0 %v220, 64
    %v1002 = vpop.permute.xlu0 %1001
    %v1008 = vsel %vm33, %v874, 0
    %v1011 = vsel %vm33, %v875, 0
    %v1014 = vsel %vm33, %v876, 0
    %v1017 = vsel %vm33, %v877, 0
    %1019 = vmatprep.subr.mxu0 0.0
    %1020 = vmatpush1.msra.mxu0 %v996
    %1021 = vmatprep.subr.mxu0 0.0
    %1022 = vmatpush1.msra.mxu0 %v998
    %1023 = vmatprep.subr.mxu0 0.0
    %1024 = vmatpush1.msra.mxu0 %v1000
    %1025 = vmatprep.subr.mxu0 0.0
    %1026 = vmatpush1.msra.mxu0 %v1002
    %1027 = vmatprep.subr.mxu0 0.0
    %1028 = vmatpush1.msra.mxu0 0.0
    %1029 = vmatprep.subr.mxu0 0.0
    %1030 = vmatpush1.msra.mxu0 0.0
    %1031 = vmatprep.subr.mxu0 0.0
    %1032 = vmatpush1.msra.mxu0 0.0
    %1033 = vmatprep.subr.mxu0 0.0
    %1034 = vmatpush1.msra.mxu0 0.0
    %1035 = vmatprep.subr.mxu0 0.0
    %1036 = vmatpush1.msra.mxu0 0.0
    %1037 = vmatprep.subr.mxu0 0.0
    %1038 = vmatpush1.msra.mxu0 0.0
    %1039 = vmatprep.subr.mxu0 0.0
    %1040 = vmatpush1.msra.mxu0 0.0
    %1041 = vmatprep.subr.mxu0 0.0
    %1042 = vmatpush1.msra.mxu0 0.0
    %1043 = vmatprep.subr.mxu0 0.0
    %1044 = vmatpush1.msra.mxu0 0.0
    %1045 = vmatprep.subr.mxu0 0.0
    %1046 = vmatpush1.msra.mxu0 0.0
    %1047 = vmatprep.subr.mxu0 0.0
    %1048 = vmatpush1.msra.mxu0 0.0
    %1049 = vmatprep.subr.mxu0 0.0
    %1050 = vmatpush1.msra.mxu0 0.0
    %1051 = vmatprep.subr.mxu0 0.0
    %1052 = vmatpush1.msra.mxu0 0.0
    %1053 = vmatprep.subr.mxu0 0.0
    %1054 = vmatpush1.msra.mxu0 0.0
    %1055 = vmatprep.subr.mxu0 0.0
    %1056 = vmatpush1.msra.mxu0 0.0
    %1057 = vmatprep.subr.mxu0 0.0
    %1058 = vmatpush1.msra.mxu0 0.0
    %1059 = vmatprep.subr.mxu0 0.0
    %1060 = vmatpush1.msra.mxu0 0.0
    %1061 = vmatprep.subr.mxu0 0.0
    %1062 = vmatpush1.msra.mxu0 0.0
    %1063 = vmatprep.subr.mxu0 0.0
    %1064 = vmatpush1.msra.mxu0 0.0
    %1065 = vmatprep.subr.mxu0 0.0
    %1066 = vmatpush1.msra.mxu0 0.0
    %1067 = vmatprep.subr.mxu0 0.0
    %1068 = vmatpush1.msra.mxu0 0.0
    %1069 = vmatprep.subr.mxu0 0.0
    %1070 = vmatpush1.msra.mxu0 0.0
    %1071 = vmatprep.subr.mxu0 0.0
    %1072 = vmatpush1.msra.mxu0 0.0
    %1073 = vmatprep.subr.mxu0 0.0
    %1074 = vmatpush1.msra.mxu0 0.0
    %1075 = vmatprep.subr.mxu0 0.0
    %1076 = vmatpush1.msra.mxu0 0.0
    %1077 = vmatprep.subr.mxu0 0.0
    %1078 = vmatpush1.msra.mxu0 0.0
    %1079 = vmatprep.subr.mxu0 0.0
    %1080 = vmatpush1.msra.mxu0 0.0
    %1081 = vmatprep.subr.mxu0 0.0
    %1082 = vmatpush1.msra.mxu0 0.0
    %1083 = vmatprep.mubr.f32.mxu0 0.0
    %1084 = vmatmul.mubr.f32.gmra.mrb[0].mxu0 %v1008
    %v1085 = vpop.f32.mrb[0].mxu0
    %v1086 = vadd.f32 0.0, %v1085
    %v1087 = vpop.f32.mrb[0].mxu0
    %1088 = vmatprep.mubr.f32.mxu0 0.0
    %1089 = vmatmul.mubr.f32.gmra.mrb[0].mxu0 %v1011
    %v1090 = vpop.f32.mrb[0].mxu0
    %v1091 = vadd.f32 0.0, %v1090
    %v1092 = vpop.f32.mrb[0].mxu0
    %1093 = vmatprep.mubr.f32.mxu0 0.0
    %1094 = vmatmul.mubr.f32.gmra.mrb[0].mxu0 %v1014
    %v1095 = vpop.f32.mrb[0].mxu0
    %v1096 = vadd.f32 0.0, %v1095
    %v1097 = vpop.f32.mrb[0].mxu0
    %1098 = vmatprep.mubr.f32.mxu0 0.0
    %1099 = vmatmul.mubr.f32.gmra.mrb[0].mxu0 %v1017
    %v1100 = vpop.f32.mrb[0].mxu0
    %v1101 = vadd.f32 0.0, %v1100
    %v1102 = vpop.f32.mrb[0].mxu0
    %1103 = vdwg.mxu0
    %1104 = vrot.lane.b32.xlu0 %v222, 64
    %v1105 = vpop.permute.xlu0 %1104
    %1106 = vrot.lane.b32.xlu0 %v224, 64
    %v1107 = vpop.permute.xlu0 %1106
    %1108 = vrot.lane.b32.xlu0 %v226, 64
    %v1109 = vpop.permute.xlu0 %1108
    %1110 = vrot.lane.b32.xlu0 %v228, 64
    %v1111 = vpop.permute.xlu0 %1110
    %v1117 = vsel %vm33, %v878, 0
    %v1120 = vsel %vm33, %v879, 0
    %v1123 = vsel %vm33, %v880, 0
    %v1126 = vsel %vm33, %v881, 0
    %1128 = vmatprep.subr.mxu0 0.0
    %1129 = vmatpush1.msra.mxu0 %v1105
    %1130 = vmatprep.subr.mxu0 0.0
    %1131 = vmatpush1.msra.mxu0 %v1107
    %1132 = vmatprep.subr.mxu0 0.0
    %1133 = vmatpush1.msra.mxu0 %v1109
    %1134 = vmatprep.subr.mxu0 0.0
    %1135 = vmatpush1.msra.mxu0 %v1111
    %1136 = vmatprep.subr.mxu0 0.0
    %1137 = vmatpush1.msra.mxu0 0.0
    %1138 = vmatprep.subr.mxu0 0.0
    %1139 = vmatpush1.msra.mxu0 0.0
    %1140 = vmatprep.subr.mxu0 0.0
    %1141 = vmatpush1.msra.mxu0 0.0
    %1142 = vmatprep.subr.mxu0 0.0
    %1143 = vmatpush1.msra.mxu0 0.0
    %1144 = vmatprep.subr.mxu0 0.0
    %1145 = vmatpush1.msra.mxu0 0.0
    %1146 = vmatprep.subr.mxu0 0.0
    %1147 = vmatpush1.msra.mxu0 0.0
    %1148 = vmatprep.subr.mxu0 0.0
    %1149 = vmatpush1.msra.mxu0 0.0
    %1150 = vmatprep.subr.mxu0 0.0
    %1151 = vmatpush1.msra.mxu0 0.0
    %1152 = vmatprep.subr.mxu0 0.0
    %1153 = vmatpush1.msra.mxu0 0.0
    %1154 = vmatprep.subr.mxu0 0.0
    %1155 = vmatpush1.msra.mxu0 0.0
    %1156 = vmatprep.subr.mxu0 0.0
    %1157 = vmatpush1.msra.mxu0 0.0
    %1158 = vmatprep.subr.mxu0 0.0
    %1159 = vmatpush1.msra.mxu0 0.0
    %1160 = vmatprep.subr.mxu0 0.0
    %1161 = vmatpush1.msra.mxu0 0.0
    %1162 = vmatprep.subr.mxu0 0.0
    %1163 = vmatpush1.msra.mxu0 0.0
    %1164 = vmatprep.subr.mxu0 0.0
    %1165 = vmatpush1.msra.mxu0 0.0
    %1166 = vmatprep.subr.mxu0 0.0
    %1167 = vmatpush1.msra.mxu0 0.0
    %1168 = vmatprep.subr.mxu0 0.0
    %1169 = vmatpush1.msra.mxu0 0.0
    %1170 = vmatprep.subr.mxu0 0.0
    %1171 = vmatpush1.msra.mxu0 0.0
    %1172 = vmatprep.subr.mxu0 0.0
    %1173 = vmatpush1.msra.mxu0 0.0
    %1174 = vmatprep.subr.mxu0 0.0
    %1175 = vmatpush1.msra.mxu0 0.0
    %1176 = vmatprep.subr.mxu0 0.0
    %1177 = vmatpush1.msra.mxu0 0.0
    %1178 = vmatprep.subr.mxu0 0.0
    %1179 = vmatpush1.msra.mxu0 0.0
    %1180 = vmatprep.subr.mxu0 0.0
    %1181 = vmatpush1.msra.mxu0 0.0
    %1182 = vmatprep.subr.mxu0 0.0
    %1183 = vmatpush1.msra.mxu0 0.0
    %1184 = vmatprep.subr.mxu0 0.0
    %1185 = vmatpush1.msra.mxu0 0.0
    %1186 = vmatprep.subr.mxu0 0.0
    %1187 = vmatpush1.msra.mxu0 0.0
    %1188 = vmatprep.subr.mxu0 0.0
    %1189 = vmatpush1.msra.mxu0 0.0
    %1190 = vmatprep.subr.mxu0 0.0
    %1191 = vmatpush1.msra.mxu0 0.0
    %1192 = vmatprep.mubr.f32.mxu0 0.0
    %1193 = vmatmul.mubr.f32.gmra.mrb[0].mxu0 %v1117
    %v1194 = vpop.f32.mrb[0].mxu0
    %v1195 = vadd.f32 0.0, %v1194
    %v1196 = vpop.f32.mrb[0].mxu0
    %1197 = vmatprep.mubr.f32.mxu0 0.0
    %1198 = vmatmul.mubr.f32.gmra.mrb[0].mxu0 %v1120
    %v1199 = vpop.f32.mrb[0].mxu0
    %v1200 = vadd.f32 0.0, %v1199
    %v1201 = vpop.f32.mrb[0].mxu0
    %1202 = vmatprep.mubr.f32.mxu0 0.0
    %1203 = vmatmul.mubr.f32.gmra.mrb[0].mxu0 %v1123
    %v1204 = vpop.f32.mrb[0].mxu0
    %v1205 = vadd.f32 0.0, %v1204
    %v1206 = vpop.f32.mrb[0].mxu0
    %1207 = vmatprep.mubr.f32.mxu0 0.0
    %1208 = vmatmul.mubr.f32.gmra.mrb[0].mxu0 %v1126
    %v1209 = vpop.f32.mrb[0].mxu0
    %v1210 = vadd.f32 0.0, %v1209
    %v1211 = vpop.f32.mrb[0].mxu0
    %1212 = vdwg.mxu0
    %1213 = vrot.lane.b32.xlu0 %v230, 64
    %v1214 = vpop.permute.xlu0 %1213
    %1215 = vrot.lane.b32.xlu0 %v232, 64
    %v1216 = vpop.permute.xlu0 %1215
    %1217 = vrot.lane.b32.xlu0 %v234, 64
    %v1218 = vpop.permute.xlu0 %1217
    %1219 = vrot.lane.b32.xlu0 %v236, 64
    %v1220 = vpop.permute.xlu0 %1219
    %v1226 = vsel %vm33, %v882, 0
    %v1229 = vsel %vm33, %v883, 0
    %v1232 = vsel %vm33, %v884, 0
    %v1235 = vsel %vm33, %v885, 0
    %1237 = vmatprep.subr.mxu0 0.0
    %1238 = vmatpush1.msra.mxu0 %v1214
    %1239 = vmatprep.subr.mxu0 0.0
    %1240 = vmatpush1.msra.mxu0 %v1216
    %1241 = vmatprep.subr.mxu0 0.0
    %1242 = vmatpush1.msra.mxu0 %v1218
    %1243 = vmatprep.subr.mxu0 0.0
    %1244 = vmatpush1.msra.mxu0 %v1220
    %1245 = vmatprep.subr.mxu0 0.0
    %1246 = vmatpush1.msra.mxu0 0.0
    %1247 = vmatprep.subr.mxu0 0.0
    %1248 = vmatpush1.msra.mxu0 0.0
    %1249 = vmatprep.subr.mxu0 0.0
    %1250 = vmatpush1.msra.mxu0 0.0
    %1251 = vmatprep.subr.mxu0 0.0
    %1252 = vmatpush1.msra.mxu0 0.0
    %1253 = vmatprep.subr.mxu0 0.0
    %1254 = vmatpush1.msra.mxu0 0.0
    %1255 = vmatprep.subr.mxu0 0.0
    %1256 = vmatpush1.msra.mxu0 0.0
    %1257 = vmatprep.subr.mxu0 0.0
    %1258 = vmatpush1.msra.mxu0 0.0
    %1259 = vmatprep.subr.mxu0 0.0
    %1260 = vmatpush1.msra.mxu0 0.0
    %1261 = vmatprep.subr.mxu0 0.0
    %1262 = vmatpush1.msra.mxu0 0.0
    %1263 = vmatprep.subr.mxu0 0.0
    %1264 = vmatpush1.msra.mxu0 0.0
    %1265 = vmatprep.subr.mxu0 0.0
    %1266 = vmatpush1.msra.mxu0 0.0
    %1267 = vmatprep.subr.mxu0 0.0
    %1268 = vmatpush1.msra.mxu0 0.0
    %1269 = vmatprep.subr.mxu0 0.0
    %1270 = vmatpush1.msra.mxu0 0.0
    %1271 = vmatprep.subr.mxu0 0.0
    %1272 = vmatpush1.msra.mxu0 0.0
    %1273 = vmatprep.subr.mxu0 0.0
    %1274 = vmatpush1.msra.mxu0 0.0
    %1275 = vmatprep.subr.mxu0 0.0
    %1276 = vmatpush1.msra.mxu0 0.0
    %1277 = vmatprep.subr.mxu0 0.0
    %1278 = vmatpush1.msra.mxu0 0.0
    %1279 = vmatprep.subr.mxu0 0.0
    %1280 = vmatpush1.msra.mxu0 0.0
    %1281 = vmatprep.subr.mxu0 0.0
    %1282 = vmatpush1.msra.mxu0 0.0
    %1283 = vmatprep.subr.mxu0 0.0
    %1284 = vmatpush1.msra.mxu0 0.0
    %1285 = vmatprep.subr.mxu0 0.0
    %1286 = vmatpush1.msra.mxu0 0.0
    %1287 = vmatprep.subr.mxu0 0.0
    %1288 = vmatpush1.msra.mxu0 0.0
    %1289 = vmatprep.subr.mxu0 0.0
    %1290 = vmatpush1.msra.mxu0 0.0
    %1291 = vmatprep.subr.mxu0 0.0
    %1292 = vmatpush1.msra.mxu0 0.0
    %1293 = vmatprep.subr.mxu0 0.0
    %1294 = vmatpush1.msra.mxu0 0.0
    %1295 = vmatprep.subr.mxu0 0.0
    %1296 = vmatpush1.msra.mxu0 0.0
    %1297 = vmatprep.subr.mxu0 0.0
    %1298 = vmatpush1.msra.mxu0 0.0
    %1299 = vmatprep.subr.mxu0 0.0
    %1300 = vmatpush1.msra.mxu0 0.0
    %1301 = vmatprep.mubr.f32.mxu0 0.0
    %1302 = vmatmul.mubr.f32.gmra.mrb[0].mxu0 %v1226
    %v1303 = vpop.f32.mrb[0].mxu0
    %v1304 = vadd.f32 0.0, %v1303
    %v1305 = vpop.f32.mrb[0].mxu0
    %1306 = vmatprep.mubr.f32.mxu0 0.0
    %1307 = vmatmul.mubr.f32.gmra.mrb[0].mxu0 %v1229
    %v1308 = vpop.f32.mrb[0].mxu0
    %v1309 = vadd.f32 0.0, %v1308
    %v1310 = vpop.f32.mrb[0].mxu0
    %1311 = vmatprep.mubr.f32.mxu0 0.0
    %1312 = vmatmul.mubr.f32.gmra.mrb[0].mxu0 %v1232
    %v1313 = vpop.f32.mrb[0].mxu0
    %v1314 = vadd.f32 0.0, %v1313
    %v1315 = vpop.f32.mrb[0].mxu0
    %1316 = vmatprep.mubr.f32.mxu0 0.0
    %1317 = vmatmul.mubr.f32.gmra.mrb[0].mxu0 %v1235
    %v1318 = vpop.f32.mrb[0].mxu0
    %v1319 = vadd.f32 0.0, %v1318
    %v1320 = vpop.f32.mrb[0].mxu0
    %1321 = vdwg.mxu0
    %1326 = vrot.lane.b32.xlu0 %v1086, 8
    %v1327 = vpop.permute.xlu0 %1326
    %1328 = vrot.lane.b32.xlu0 %v1091, 8
    %v1329 = vpop.permute.xlu0 %1328
    %1330 = vrot.lane.b32.xlu0 %v1096, 8
    %v1331 = vpop.permute.xlu0 %1330
    %1332 = vrot.lane.b32.xlu0 %v1101, 8
    %v1333 = vpop.permute.xlu0 %1332
    %1342 = vrot.lane.b32.xlu0 %v1195, 16
    %v1343 = vpop.permute.xlu0 %1342
    %1344 = vrot.lane.b32.xlu0 %v1200, 16
    %v1345 = vpop.permute.xlu0 %1344
    %1346 = vrot.lane.b32.xlu0 %v1205, 16
    %v1347 = vpop.permute.xlu0 %1346
    %1348 = vrot.lane.b32.xlu0 %v1210, 16
    %v1349 = vpop.permute.xlu0 %1348
    %1358 = vrot.lane.b32.xlu0 %v1304, 24
    %v1359 = vpop.permute.xlu0 %1358
    %1360 = vrot.lane.b32.xlu0 %v1309, 24
    %v1361 = vpop.permute.xlu0 %1360
    %1362 = vrot.lane.b32.xlu0 %v1314, 24
    %v1363 = vpop.permute.xlu0 %1362
    %1364 = vrot.lane.b32.xlu0 %v1319, 24
    %v1365 = vpop.permute.xlu0 %1364
    %v1370 = vsel %vm245, %v977, %v1327
    %v1371 = vsel %vm245, %v982, %v1329
    %v1372 = vsel %vm245, %v987, %v1331
    %v1373 = vsel %vm245, %v992, %v1333
    %vm1374 = vcmask 130048
    %v1375 = vsel %vm1374, %v1370, %v1343
    %v1376 = vsel %vm1374, %v1371, %v1345
    %v1377 = vsel %vm1374, %v1372, %v1347
    %v1378 = vsel %vm1374, %v1373, %v1349
    %vm1379 = vcmask 195584
    %v1380 = vsel %vm1379, %v1375, %v1359
    %v1381 = vsel %vm1379, %v1376, %v1361
    %v1382 = vsel %vm1379, %v1377, %v1363
    %v1383 = vsel %vm1379, %v1378, %v1365
    %v1384 = vld [vmem:[%s3] sm:$0xff]
    %v1385 = vld [vmem:[%s3 + $0x10] sm:$0xff]
    %v1386 = vld [vmem:[%s3 + $0x20] sm:$0xff]
    %v1387 = vld [vmem:[%s3 + $0x30] sm:$0xff]
    %v1388 = vld [vmem:[%s2 + $0x6] sm:$0x1]
    %v1389 = vlaneseq
    %v1390 = vshrl.u32 %v1389, 7
    %v1391 = vsub.s32 0, %v1390
    %v1392 = vrot.slane %v1388, %v1391
    %1397 = vrot.lane.b32.xlu0 %v1384, 32
    %v1398 = vpop.permute.xlu0 %1397
    %1399 = vrot.lane.b32.xlu0 %v1385, 32
    %v1400 = vpop.permute.xlu0 %1399
    %1401 = vrot.lane.b32.xlu0 %v1386, 32
    %v1402 = vpop.permute.xlu0 %1401
    %1403 = vrot.lane.b32.xlu0 %v1387, 32
    %v1404 = vpop.permute.xlu0 %1403
    %v1410 = vsel %vm33, %v1380, 0
    %v1413 = vsel %vm33, %v1381, 0
    %v1416 = vsel %vm33, %v1382, 0
    %v1419 = vsel %vm33, %v1383, 0
    %1421 = vmatprep.subr.mxu0 0.0
    %1422 = vmatpush1.msra.mxu0 %v1398
    %1423 = vmatprep.subr.mxu0 0.0
    %1424 = vmatpush1.msra.mxu0 %v1400
    %1425 = vmatprep.subr.mxu0 0.0
    %1426 = vmatpush1.msra.mxu0 %v1402
    %1427 = vmatprep.subr.mxu0 0.0
    %1428 = vmatpush1.msra.mxu0 %v1404
    %1429 = vmatprep.subr.mxu0 0.0
    %1430 = vmatpush1.msra.mxu0 0.0
    %1431 = vmatprep.subr.mxu0 0.0
    %1432 = vmatpush1.msra.mxu0 0.0
    %1433 = vmatprep.subr.mxu0 0.0
    %1434 = vmatpush1.msra.mxu0 0.0
    %1435 = vmatprep.subr.mxu0 0.0
    %1436 = vmatpush1.msra.mxu0 0.0
    %1437 = vmatprep.subr.mxu0 0.0
    %1438 = vmatpush1.msra.mxu0 0.0
    %1439 = vmatprep.subr.mxu0 0.0
    %1440 = vmatpush1.msra.mxu0 0.0
    %1441 = vmatprep.subr.mxu0 0.0
    %1442 = vmatpush1.msra.mxu0 0.0
    %1443 = vmatprep.subr.mxu0 0.0
    %1444 = vmatpush1.msra.mxu0 0.0
    %1445 = vmatprep.subr.mxu0 0.0
    %1446 = vmatpush1.msra.mxu0 0.0
    %1447 = vmatprep.subr.mxu0 0.0
    %1448 = vmatpush1.msra.mxu0 0.0
    %1449 = vmatprep.subr.mxu0 0.0
    %1450 = vmatpush1.msra.mxu0 0.0
    %1451 = vmatprep.subr.mxu0 0.0
    %1452 = vmatpush1.msra.mxu0 0.0
    %1453 = vmatprep.subr.mxu0 0.0
    %1454 = vmatpush1.msra.mxu0 0.0
    %1455 = vmatprep.subr.mxu0 0.0
    %1456 = vmatpush1.msra.mxu0 0.0
    %1457 = vmatprep.subr.mxu0 0.0
    %1458 = vmatpush1.msra.mxu0 0.0
    %1459 = vmatprep.subr.mxu0 0.0
    %1460 = vmatpush1.msra.mxu0 0.0
    %1461 = vmatprep.subr.mxu0 0.0
    %1462 = vmatpush1.msra.mxu0 0.0
    %1463 = vmatprep.subr.mxu0 0.0
    %1464 = vmatpush1.msra.mxu0 0.0
    %1465 = vmatprep.subr.mxu0 0.0
    %1466 = vmatpush1.msra.mxu0 0.0
    %1467 = vmatprep.subr.mxu0 0.0
    %1468 = vmatpush1.msra.mxu0 0.0
    %1469 = vmatprep.subr.mxu0 0.0
    %1470 = vmatpush1.msra.mxu0 0.0
    %1471 = vmatprep.subr.mxu0 0.0
    %1472 = vmatpush1.msra.mxu0 0.0
    %1473 = vmatprep.subr.mxu0 0.0
    %1474 = vmatpush1.msra.mxu0 0.0
    %1475 = vmatprep.subr.mxu0 0.0
    %1476 = vmatpush1.msra.mxu0 0.0
    %1477 = vmatprep.subr.mxu0 0.0
    %1478 = vmatpush1.msra.mxu0 0.0
    %1479 = vmatprep.subr.mxu0 0.0
    %1480 = vmatpush1.msra.mxu0 0.0
    %1481 = vmatprep.subr.mxu0 0.0
    %1482 = vmatpush1.msra.mxu0 0.0
    %1483 = vmatprep.subr.mxu0 0.0
    %1484 = vmatpush1.msra.mxu0 0.0
    %1485 = vmatprep.mubr.f32.mxu0 0.0
    %1486 = vmatmul.mubr.f32.gmra.mrb[0].mxu0 %v1410
    %v1487 = vpop.f32.mrb[0].mxu0
    %v1488 = vadd.f32 %v1392, %v1487
    %v1489 = vpop.f32.mrb[0].mxu0
    %1490 = vmatprep.mubr.f32.mxu0 0.0
    %1491 = vmatmul.mubr.f32.gmra.mrb[0].mxu0 %v1413
    %v1492 = vpop.f32.mrb[0].mxu0
    %v1493 = vadd.f32 %v1392, %v1492
    %v1494 = vpop.f32.mrb[0].mxu0
    %1495 = vmatprep.mubr.f32.mxu0 0.0
    %1496 = vmatmul.mubr.f32.gmra.mrb[0].mxu0 %v1416
    %v1497 = vpop.f32.mrb[0].mxu0
    %v1498 = vadd.f32 %v1392, %v1497
    %v1499 = vpop.f32.mrb[0].mxu0
    %1500 = vmatprep.mubr.f32.mxu0 0.0
    %1501 = vmatmul.mubr.f32.gmra.mrb[0].mxu0 %v1419
    %v1502 = vpop.f32.mrb[0].mxu0
    %v1503 = vadd.f32 %v1392, %v1502
    %v1504 = vpop.f32.mrb[0].mxu0
    %1505 = vdwg.mxu0
    %v1506 = vadd.f32 %v99, %v1488
    %v1507 = vadd.f32 %v100, %v1493
    %v1508 = vadd.f32 %v101, %v1498
    %v1509 = vadd.f32 %v102, %v1503
    %v1510 = vld [vmem:[%s2 + $0x2] sm:$0x1]
    %v1511 = vld [vmem:[%s2 + $0x3] sm:$0x1]
    %v1512 = vsel %vm33, %v1506, 0.0
    %1513 = vadd.xlane.f32.xlu0 %v1512
    %v1514 = vpop.xlane.xlu0 %1513
    %v1515 = vsel %vm33, %v1507, 0.0
    %1516 = vadd.xlane.f32.xlu0 %v1515
    %v1517 = vpop.xlane.xlu0 %1516
    %v1518 = vsel %vm33, %v1508, 0.0
    %1519 = vadd.xlane.f32.xlu0 %v1518
    %v1520 = vpop.xlane.xlu0 %1519
    %v1521 = vsel %vm33, %v1509, 0.0
    %1522 = vadd.xlane.f32.xlu0 %v1521
    %v1523 = vpop.xlane.xlu0 %1522
    %v1524 = vmul.f32 %v1514, %v46
    %v1525 = vmul.f32 %v1517, %v46
    %v1526 = vmul.f32 %v1520, %v46
    %v1527 = vmul.f32 %v1523, %v46
    %v1528 = vsub.f32 %v1506, %v1524
    %v1529 = vsub.f32 %v1507, %v1525
    %v1530 = vsub.f32 %v1508, %v1526
    %v1531 = vsub.f32 %v1509, %v1527
    %v1532 = vmul.f32 %v1528, %v1528
    %v1533 = vmul.f32 %v1529, %v1529
    %v1534 = vmul.f32 %v1530, %v1530
    %v1535 = vmul.f32 %v1531, %v1531
    %v1536 = vsel %vm33, %v1532, 0.0
    %1537 = vadd.xlane.f32.xlu0 %v1536
    %v1538 = vpop.xlane.xlu0 %1537
    %v1539 = vsel %vm33, %v1533, 0.0
    %1540 = vadd.xlane.f32.xlu0 %v1539
    %v1541 = vpop.xlane.xlu0 %1540
    %v1542 = vsel %vm33, %v1534, 0.0
    %1543 = vadd.xlane.f32.xlu0 %v1542
    %v1544 = vpop.xlane.xlu0 %1543
    %v1545 = vsel %vm33, %v1535, 0.0
    %1546 = vadd.xlane.f32.xlu0 %v1545
    %v1547 = vpop.xlane.xlu0 %1546
    %v1548 = vmul.f32 %v1538, %v46
    %v1549 = vmul.f32 %v1541, %v46
    %v1550 = vmul.f32 %v1544, %v46
    %v1551 = vmul.f32 %v1547, %v46
    %v1552 = vadd.f32 %v1548, 1e-12
    %v1553 = vadd.f32 %v1549, 1e-12
    %v1554 = vadd.f32 %v1550, 1e-12
    %v1555 = vadd.f32 %v1551, 1e-12
    %v1556 = vrsqrt.pop %v1552
    %v1557 = vrsqrt.pop %v1553
    %v1558 = vrsqrt.pop %v1554
    %v1559 = vrsqrt.pop %v1555
    %v1560 = vmul.f32 %v1528, %v1556
    %v1561 = vmul.f32 %v1529, %v1557
    %v1562 = vmul.f32 %v1530, %v1558
    %v1563 = vmul.f32 %v1531, %v1559
    %v1564 = vlaneseq
    %v1565 = vshrl.u32 %v1564, 7
    %v1566 = vsub.s32 0, %v1565
    %v1567 = vrot.slane %v1510, %v1566
    %v1568 = vmul.f32 %v1560, %v1567
    %v1569 = vmul.f32 %v1561, %v1567
    %v1570 = vmul.f32 %v1562, %v1567
    %v1571 = vmul.f32 %v1563, %v1567
    %v1572 = vlaneseq
    %v1573 = vshrl.u32 %v1572, 7
    %v1574 = vsub.s32 0, %v1573
    %v1575 = vrot.slane %v1511, %v1574
    %v1576 = vadd.f32 %v1568, %v1575
    %v1577 = vadd.f32 %v1569, %v1575
    %v1578 = vadd.f32 %v1570, %v1575
    %v1579 = vadd.f32 %v1571, %v1575
    %v1580 = vld [vmem:[%s3 + $0x8] sm:$0xff]
    %v1581 = vld [vmem:[%s3 + $0x18] sm:$0xff]
    %v1582 = vld [vmem:[%s3 + $0x28] sm:$0xff]
    %v1583 = vld [vmem:[%s3 + $0x38] sm:$0xff]
    %v1584 = vld [vmem:[%s2 + $0x9] sm:$0x1]
    %v1585 = vlaneseq
    %v1586 = vshrl.u32 %v1585, 7
    %v1587 = vsub.s32 0, %v1586
    %v1588 = vrot.slane %v1584, %v1587
    %v1590 = vsel %vm33, %v1576, 0
    %v1593 = vsel %vm33, %v1577, 0
    %v1596 = vsel %vm33, %v1578, 0
    %v1599 = vsel %vm33, %v1579, 0
    %1601 = vmatprep.subr.mxu0 0.0
    %1602 = vmatpush1.msra.mxu0 %v1580
    %1603 = vmatprep.subr.mxu0 0.0
    %1604 = vmatpush1.msra.mxu0 %v1581
    %1605 = vmatprep.subr.mxu0 0.0
    %1606 = vmatpush1.msra.mxu0 %v1582
    %1607 = vmatprep.subr.mxu0 0.0
    %1608 = vmatpush1.msra.mxu0 %v1583
    %1609 = vmatprep.subr.mxu0 0.0
    %1610 = vmatpush1.msra.mxu0 0.0
    %1611 = vmatprep.subr.mxu0 0.0
    %1612 = vmatpush1.msra.mxu0 0.0
    %1613 = vmatprep.subr.mxu0 0.0
    %1614 = vmatpush1.msra.mxu0 0.0
    %1615 = vmatprep.subr.mxu0 0.0
    %1616 = vmatpush1.msra.mxu0 0.0
    %1617 = vmatprep.subr.mxu0 0.0
    %1618 = vmatpush1.msra.mxu0 0.0
    %1619 = vmatprep.subr.mxu0 0.0
    %1620 = vmatpush1.msra.mxu0 0.0
    %1621 = vmatprep.subr.mxu0 0.0
    %1622 = vmatpush1.msra.mxu0 0.0
    %1623 = vmatprep.subr.mxu0 0.0
    %1624 = vmatpush1.msra.mxu0 0.0
    %1625 = vmatprep.subr.mxu0 0.0
    %1626 = vmatpush1.msra.mxu0 0.0
    %1627 = vmatprep.subr.mxu0 0.0
    %1628 = vmatpush1.msra.mxu0 0.0
    %1629 = vmatprep.subr.mxu0 0.0
    %1630 = vmatpush1.msra.mxu0 0.0
    %1631 = vmatprep.subr.mxu0 0.0
    %1632 = vmatpush1.msra.mxu0 0.0
    %1633 = vmatprep.subr.mxu0 0.0
    %1634 = vmatpush1.msra.mxu0 0.0
    %1635 = vmatprep.subr.mxu0 0.0
    %1636 = vmatpush1.msra.mxu0 0.0
    %1637 = vmatprep.subr.mxu0 0.0
    %1638 = vmatpush1.msra.mxu0 0.0
    %1639 = vmatprep.subr.mxu0 0.0
    %1640 = vmatpush1.msra.mxu0 0.0
    %1641 = vmatprep.subr.mxu0 0.0
    %1642 = vmatpush1.msra.mxu0 0.0
    %1643 = vmatprep.subr.mxu0 0.0
    %1644 = vmatpush1.msra.mxu0 0.0
    %1645 = vmatprep.subr.mxu0 0.0
    %1646 = vmatpush1.msra.mxu0 0.0
    %1647 = vmatprep.subr.mxu0 0.0
    %1648 = vmatpush1.msra.mxu0 0.0
    %1649 = vmatprep.subr.mxu0 0.0
    %1650 = vmatpush1.msra.mxu0 0.0
    %1651 = vmatprep.subr.mxu0 0.0
    %1652 = vmatpush1.msra.mxu0 0.0
    %1653 = vmatprep.subr.mxu0 0.0
    %1654 = vmatpush1.msra.mxu0 0.0
    %1655 = vmatprep.subr.mxu0 0.0
    %1656 = vmatpush1.msra.mxu0 0.0
    %1657 = vmatprep.subr.mxu0 0.0
    %1658 = vmatpush1.msra.mxu0 0.0
    %1659 = vmatprep.subr.mxu0 0.0
    %1660 = vmatpush1.msra.mxu0 0.0
    %1661 = vmatprep.subr.mxu0 0.0
    %1662 = vmatpush1.msra.mxu0 0.0
    %1663 = vmatprep.subr.mxu0 0.0
    %1664 = vmatpush1.msra.mxu0 0.0
    %1665 = vmatprep.mubr.f32.mxu0 0.0
    %1666 = vmatmul.mubr.f32.gmra.mrb[0].mxu0 %v1590
    %v1667 = vpop.f32.mrb[0].mxu0
    %v1668 = vadd.f32 %v1588, %v1667
    %v1669 = vpop.f32.mrb[0].mxu0
    %1670 = vmatprep.mubr.f32.mxu0 0.0
    %1671 = vmatmul.mubr.f32.gmra.mrb[0].mxu0 %v1593
    %v1672 = vpop.f32.mrb[0].mxu0
    %v1673 = vadd.f32 %v1588, %v1672
    %v1674 = vpop.f32.mrb[0].mxu0
    %1675 = vmatprep.mubr.f32.mxu0 0.0
    %1676 = vmatmul.mubr.f32.gmra.mrb[0].mxu0 %v1596
    %v1677 = vpop.f32.mrb[0].mxu0
    %v1678 = vadd.f32 %v1588, %v1677
    %v1679 = vpop.f32.mrb[0].mxu0
    %1680 = vmatprep.mubr.f32.mxu0 0.0
    %1681 = vmatmul.mubr.f32.gmra.mrb[0].mxu0 %v1599
    %v1682 = vpop.f32.mrb[0].mxu0
    %v1683 = vadd.f32 %v1588, %v1682
    %v1684 = vpop.f32.mrb[0].mxu0
    %1685 = vdwg.mxu0
    %v1686 = vmul.f32 %v1668, %v1668
    %v1687 = vmul.f32 %v1673, %v1673
    %v1688 = vmul.f32 %v1678, %v1678
    %v1689 = vmul.f32 %v1683, %v1683
    %v1690 = vmul.f32 %v1668, %v1686
    %v1691 = vmul.f32 %v1673, %v1687
    %v1692 = vmul.f32 %v1678, %v1688
    %v1693 = vmul.f32 %v1683, %v1689
    %v1694 = vmul.f32 %v1690, 0.044715
    %v1695 = vmul.f32 %v1691, 0.044715
    %v1696 = vmul.f32 %v1692, 0.044715
    %v1697 = vmul.f32 %v1693, 0.044715
    %v1698 = vadd.f32 %v1668, %v1694
    %v1699 = vadd.f32 %v1673, %v1695
    %v1700 = vadd.f32 %v1678, %v1696
    %v1701 = vadd.f32 %v1683, %v1697
    %v1702 = vmul.f32 %v1698, 0.7978846
    %v1703 = vmul.f32 %v1699, 0.7978846
    %v1704 = vmul.f32 %v1700, 0.7978846
    %v1705 = vmul.f32 %v1701, 0.7978846
    %v1706 = vtanh.pop %v1702
    %v1707 = vtanh.pop %v1703
    %v1708 = vtanh.pop %v1704
    %v1709 = vtanh.pop %v1705
    %v1710 = vadd.f32 %v1706, 1.0
    %v1711 = vadd.f32 %v1707, 1.0
    %v1712 = vadd.f32 %v1708, 1.0
    %v1713 = vadd.f32 %v1709, 1.0
    %v1714 = vmul.f32 %v1710, 0.5
    %v1715 = vmul.f32 %v1711, 0.5
    %v1716 = vmul.f32 %v1712, 0.5
    %v1717 = vmul.f32 %v1713, 0.5
    %v1718 = vmul.f32 %v1668, %v1714
    %v1719 = vmul.f32 %v1673, %v1715
    %v1720 = vmul.f32 %v1678, %v1716
    %v1721 = vmul.f32 %v1683, %v1717
    %v1722 = vld [vmem:[%s4] sm:$0xff]
    %v1723 = vld [vmem:[%s4 + $0x8] sm:$0xff]
    %v1724 = vld [vmem:[%s4 + $0x10] sm:$0xff]
    %v1725 = vld [vmem:[%s4 + $0x18] sm:$0xff]
    %v1726 = vld [vmem:[%s4 + $0x20] sm:$0xff]
    %v1727 = vld [vmem:[%s4 + $0x28] sm:$0xff]
    %v1728 = vld [vmem:[%s4 + $0x30] sm:$0xff]
    %v1729 = vld [vmem:[%s4 + $0x38] sm:$0xff]
    %v1730 = vld [vmem:[%s4 + $0x40] sm:$0xff]
    %v1731 = vld [vmem:[%s4 + $0x48] sm:$0xff]
    %v1732 = vld [vmem:[%s4 + $0x50] sm:$0xff]
    %v1733 = vld [vmem:[%s4 + $0x58] sm:$0xff]
    %v1734 = vld [vmem:[%s4 + $0x60] sm:$0xff]
    %v1735 = vld [vmem:[%s4 + $0x68] sm:$0xff]
    %v1736 = vld [vmem:[%s4 + $0x70] sm:$0xff]
    %v1737 = vld [vmem:[%s4 + $0x78] sm:$0xff]
    %v1738 = vld [vmem:[%s2 + $0x7] sm:$0x1]
    %v1739 = vlaneseq
    %v1740 = vshrl.u32 %v1739, 7
    %v1741 = vsub.s32 0, %v1740
    %v1742 = vrot.slane %v1738, %v1741
    %1743 = vmatprep.subr.mxu0 0.0
    %1744 = vmatpush1.msra.mxu0 %v1722
    %1745 = vmatprep.subr.mxu0 0.0
    %1746 = vmatpush1.msra.mxu0 %v1723
    %1747 = vmatprep.subr.mxu0 0.0
    %1748 = vmatpush1.msra.mxu0 %v1724
    %1749 = vmatprep.subr.mxu0 0.0
    %1750 = vmatpush1.msra.mxu0 %v1725
    %1751 = vmatprep.subr.mxu0 0.0
    %1752 = vmatpush1.msra.mxu0 %v1726
    %1753 = vmatprep.subr.mxu0 0.0
    %1754 = vmatpush1.msra.mxu0 %v1727
    %1755 = vmatprep.subr.mxu0 0.0
    %1756 = vmatpush1.msra.mxu0 %v1728
    %1757 = vmatprep.subr.mxu0 0.0
    %1758 = vmatpush1.msra.mxu0 %v1729
    %1759 = vmatprep.subr.mxu0 0.0
    %1760 = vmatpush1.msra.mxu0 %v1730
    %1761 = vmatprep.subr.mxu0 0.0
    %1762 = vmatpush1.msra.mxu0 %v1731
    %1763 = vmatprep.subr.mxu0 0.0
    %1764 = vmatpush1.msra.mxu0 %v1732
    %1765 = vmatprep.subr.mxu0 0.0
    %1766 = vmatpush1.msra.mxu0 %v1733
    %1767 = vmatprep.subr.mxu0 0.0
    %1768 = vmatpush1.msra.mxu0 %v1734
    %1769 = vmatprep.subr.mxu0 0.0
    %1770 = vmatpush1.msra.mxu0 %v1735
    %1771 = vmatprep.subr.mxu0 0.0
    %1772 = vmatpush1.msra.mxu0 %v1736
    %1773 = vmatprep.subr.mxu0 0.0
    %1774 = vmatpush1.msra.mxu0 %v1737
    %1775 = vmatprep.subr.mxu0 0.0
    %1776 = vmatpush1.msra.mxu0 0.0
    %1777 = vmatprep.subr.mxu0 0.0
    %1778 = vmatpush1.msra.mxu0 0.0
    %1779 = vmatprep.subr.mxu0 0.0
    %1780 = vmatpush1.msra.mxu0 0.0
    %1781 = vmatprep.subr.mxu0 0.0
    %1782 = vmatpush1.msra.mxu0 0.0
    %1783 = vmatprep.subr.mxu0 0.0
    %1784 = vmatpush1.msra.mxu0 0.0
    %1785 = vmatprep.subr.mxu0 0.0
    %1786 = vmatpush1.msra.mxu0 0.0
    %1787 = vmatprep.subr.mxu0 0.0
    %1788 = vmatpush1.msra.mxu0 0.0
    %1789 = vmatprep.subr.mxu0 0.0
    %1790 = vmatpush1.msra.mxu0 0.0
    %1791 = vmatprep.subr.mxu0 0.0
    %1792 = vmatpush1.msra.mxu0 0.0
    %1793 = vmatprep.subr.mxu0 0.0
    %1794 = vmatpush1.msra.mxu0 0.0
    %1795 = vmatprep.subr.mxu0 0.0
    %1796 = vmatpush1.msra.mxu0 0.0
    %1797 = vmatprep.subr.mxu0 0.0
    %1798 = vmatpush1.msra.mxu0 0.0
    %1799 = vmatprep.subr.mxu0 0.0
    %1800 = vmatpush1.msra.mxu0 0.0
    %1801 = vmatprep.subr.mxu0 0.0
    %1802 = vmatpush1.msra.mxu0 0.0
    %1803 = vmatprep.subr.mxu0 0.0
    %1804 = vmatpush1.msra.mxu0 0.0
    %1805 = vmatprep.subr.mxu0 0.0
    %1806 = vmatpush1.msra.mxu0 0.0
    %1807 = vmatprep.mubr.f32.mxu0 0.0
    %1808 = vmatmul.mubr.f32.gmra.mrb[0].mxu0 %v1718
    %v1809 = vpop.f32.mrb[0].mxu0
    %v1810 = vadd.f32 %v1742, %v1809
    %v1811 = vpop.f32.mrb[0].mxu0
    %1812 = vmatprep.mubr.f32.mxu0 0.0
    %1813 = vmatmul.mubr.f32.gmra.mrb[0].mxu0 %v1719
    %v1814 = vpop.f32.mrb[0].mxu0
    %v1815 = vadd.f32 %v1742, %v1814
    %v1816 = vpop.f32.mrb[0].mxu0
    %1817 = vmatprep.mubr.f32.mxu0 0.0
    %1818 = vmatmul.mubr.f32.gmra.mrb[0].mxu0 %v1720
    %v1819 = vpop.f32.mrb[0].mxu0
    %v1820 = vadd.f32 %v1742, %v1819
    %v1821 = vpop.f32.mrb[0].mxu0
    %1822 = vmatprep.mubr.f32.mxu0 0.0
    %1823 = vmatmul.mubr.f32.gmra.mrb[0].mxu0 %v1721
    %v1824 = vpop.f32.mrb[0].mxu0
    %v1825 = vadd.f32 %v1742, %v1824
    %v1826 = vpop.f32.mrb[0].mxu0
    %1827 = vdwg.mxu0
    %v1828 = vadd.f32 %v1576, %v1810
    %v1829 = vadd.f32 %v1577, %v1815
    %v1830 = vadd.f32 %v1578, %v1820
    %v1831 = vadd.f32 %v1579, %v1825
    %v1832 = vld [vmem:[%s2 + $0x4] sm:$0x1]
    %v1833 = vld [vmem:[%s2 + $0x5] sm:$0x1]
    %v1834 = vsel %vm33, %v1828, 0.0
    %1835 = vadd.xlane.f32.xlu0 %v1834
    %v1836 = vpop.xlane.xlu0 %1835
    %v1837 = vsel %vm33, %v1829, 0.0
    %1838 = vadd.xlane.f32.xlu0 %v1837
    %v1839 = vpop.xlane.xlu0 %1838
    %v1840 = vsel %vm33, %v1830, 0.0
    %1841 = vadd.xlane.f32.xlu0 %v1840
    %v1842 = vpop.xlane.xlu0 %1841
    %v1843 = vsel %vm33, %v1831, 0.0
    %1844 = vadd.xlane.f32.xlu0 %v1843
    %v1845 = vpop.xlane.xlu0 %1844
    %v1846 = vmul.f32 %v1836, %v46
    %v1847 = vmul.f32 %v1839, %v46
    %v1848 = vmul.f32 %v1842, %v46
    %v1849 = vmul.f32 %v1845, %v46
    %v1850 = vsub.f32 %v1828, %v1846
    %v1851 = vsub.f32 %v1829, %v1847
    %v1852 = vsub.f32 %v1830, %v1848
    %v1853 = vsub.f32 %v1831, %v1849
    %v1854 = vmul.f32 %v1850, %v1850
    %v1855 = vmul.f32 %v1851, %v1851
    %v1856 = vmul.f32 %v1852, %v1852
    %v1857 = vmul.f32 %v1853, %v1853
    %v1858 = vsel %vm33, %v1854, 0.0
    %1859 = vadd.xlane.f32.xlu0 %v1858
    %v1860 = vpop.xlane.xlu0 %1859
    %v1861 = vsel %vm33, %v1855, 0.0
    %1862 = vadd.xlane.f32.xlu0 %v1861
    %v1863 = vpop.xlane.xlu0 %1862
    %v1864 = vsel %vm33, %v1856, 0.0
    %1865 = vadd.xlane.f32.xlu0 %v1864
    %v1866 = vpop.xlane.xlu0 %1865
    %v1867 = vsel %vm33, %v1857, 0.0
    %1868 = vadd.xlane.f32.xlu0 %v1867
    %v1869 = vpop.xlane.xlu0 %1868
    %v1870 = vmul.f32 %v1860, %v46
    %v1871 = vmul.f32 %v1863, %v46
    %v1872 = vmul.f32 %v1866, %v46
    %v1873 = vmul.f32 %v1869, %v46
    %v1874 = vadd.f32 %v1870, 1e-12
    %v1875 = vadd.f32 %v1871, 1e-12
    %v1876 = vadd.f32 %v1872, 1e-12
    %v1877 = vadd.f32 %v1873, 1e-12
    %v1878 = vrsqrt.pop %v1874
    %v1879 = vrsqrt.pop %v1875
    %v1880 = vrsqrt.pop %v1876
    %v1881 = vrsqrt.pop %v1877
    %v1882 = vmul.f32 %v1850, %v1878
    %v1883 = vmul.f32 %v1851, %v1879
    %v1884 = vmul.f32 %v1852, %v1880
    %v1885 = vmul.f32 %v1853, %v1881
    %v1886 = vlaneseq
    %v1887 = vshrl.u32 %v1886, 7
    %v1888 = vsub.s32 0, %v1887
    %v1889 = vrot.slane %v1832, %v1888
    %v1890 = vmul.f32 %v1882, %v1889
    %v1891 = vmul.f32 %v1883, %v1889
    %v1892 = vmul.f32 %v1884, %v1889
    %v1893 = vmul.f32 %v1885, %v1889
    %v1894 = vlaneseq
    %v1895 = vshrl.u32 %v1894, 7
    %v1896 = vsub.s32 0, %v1895
    %v1897 = vrot.slane %v1833, %v1896
    %v1898 = vadd.f32 %v1890, %v1897
    %v1899 = vadd.f32 %v1891, %v1897
    %v1900 = vadd.f32 %v1892, %v1897
    %v1901 = vadd.f32 %v1893, %v1897
    %vm1906 = vcmask 1046528
    %v1907 = vrot.slane %v1898, 1
    %v1908 = vrot.slane %v1899, 1
    %v1909 = vsel %vm1906, %v1907, %v1908
    %v1910 = vrot.slane %v1900, 1
    %v1911 = vsel %vm1906, %v1908, %v1910
    %v1912 = vrot.slane %v1901, 1
    %v1913 = vsel %vm1906, %v1910, %v1912
    %v1916 = vsel %vm1906, %v1912, %v1907
    %vm1917 = vcmask 1045504
    %v1918 = vrot.slane %v1898, 2
    %v1919 = vrot.slane %v1899, 2
    %v1920 = vsel %vm1917, %v1918, %v1919
    %v1921 = vrot.slane %v1900, 2
    %v1922 = vsel %vm1917, %v1919, %v1921
    %v1923 = vrot.slane %v1901, 2
    %v1924 = vsel %vm1917, %v1921, %v1923
    %v1927 = vsel %vm1917, %v1923, %v1918
    %vm1928 = vcmask 1044480
    %v1929 = vrot.slane %v1898, 3
    %v1930 = vrot.slane %v1899, 3
    %v1931 = vsel %vm1928, %v1929, %v1930
    %v1932 = vrot.slane %v1900, 3
    %v1933 = vsel %vm1928, %v1930, %v1932
    %v1934 = vrot.slane %v1901, 3
    %v1935 = vsel %vm1928, %v1932, %v1934
    %v1938 = vsel %vm1928, %v1934, %v1929
    %1940 = vrot.lane.b32.xlu0 %v1909, 32
    %v1941 = vpop.permute.xlu0 %1940
    %1942 = vrot.lane.b32.xlu0 %v1911, 32
    %v1943 = vpop.permute.xlu0 %1942
    %1944 = vrot.lane.b32.xlu0 %v1913, 32
    %v1945 = vpop.permute.xlu0 %1944
    %1946 = vrot.lane.b32.xlu0 %v1916, 32
    %v1947 = vpop.permute.xlu0 %1946
    %1953 = vrot.lane.b32.xlu0 %v1920, 64
    %v1954 = vpop.permute.xlu0 %1953
    %1955 = vrot.lane.b32.xlu0 %v1922, 64
    %v1956 = vpop.permute.xlu0 %1955
    %1957 = vrot.lane.b32.xlu0 %v1924, 64
    %v1958 = vpop.permute.xlu0 %1957
    %1959 = vrot.lane.b32.xlu0 %v1927, 64
    %v1960 = vpop.permute.xlu0 %1959
    %1966 = vrot.lane.b32.xlu0 %v1931, 96
    %v1967 = vpop.permute.xlu0 %1966
    %1968 = vrot.lane.b32.xlu0 %v1933, 96
    %v1969 = vpop.permute.xlu0 %1968
    %1970 = vrot.lane.b32.xlu0 %v1935, 96
    %v1971 = vpop.permute.xlu0 %1970
    %1972 = vrot.lane.b32.xlu0 %v1938, 96
    %v1973 = vpop.permute.xlu0 %1972
    %v1978 = vsel %vm33, %v1898, %v1941
    %v1979 = vsel %vm33, %v1899, %v1943
    %v1980 = vsel %vm33, %v1900, %v1945
    %v1981 = vsel %vm33, %v1901, %v1947
    %vm1982 = vcmask 523264
    %v1983 = vsel %vm1982, %v1978, %v1954
    %v1984 = vsel %vm1982, %v1979, %v1956
    %v1985 = vsel %vm1982, %v1980, %v1958
    %v1986 = vsel %vm1982, %v1981, %v1960
    %vm1987 = vcmask 785408
    %v1988 = vsel %vm1987, %v1983, %v1967
    %v1989 = vsel %vm1987, %v1984, %v1969
    %v1990 = vsel %vm1987, %v1985, %v1971
    %v1991 = vsel %vm1987, %v1986, %v1973
    %v1992 = vld [vmem:[%s5] sm:$0xff]
    %v1993 = vld [vmem:[%s5 + $0x8] sm:$0xff]
    %v1994 = vld [vmem:[%s5 + $0x10] sm:$0xff]
    %v1995 = vld [vmem:[%s5 + $0x18] sm:$0xff]
    %v1996 = vld [vmem:[%s5 + $0x20] sm:$0xff]
    %v1997 = vld [vmem:[%s5 + $0x28] sm:$0xff]
    %v1998 = vld [vmem:[%s5 + $0x30] sm:$0xff]
    %v1999 = vld [vmem:[%s5 + $0x38] sm:$0xff]
    %v2000 = vld [vmem:[%s5 + $0x40] sm:$0xff]
    %v2001 = vld [vmem:[%s5 + $0x48] sm:$0xff]
    %v2002 = vld [vmem:[%s5 + $0x50] sm:$0xff]
    %v2003 = vld [vmem:[%s5 + $0x58] sm:$0xff]
    %v2004 = vld [vmem:[%s5 + $0x60] sm:$0xff]
    %v2005 = vld [vmem:[%s5 + $0x68] sm:$0xff]
    %v2006 = vld [vmem:[%s5 + $0x70] sm:$0xff]
    %v2007 = vld [vmem:[%s5 + $0x78] sm:$0xff]
    %v2008 = vld [vmem:[%s2 + $0xa] sm:$0x1]
    %v2009 = vlaneseq
    %v2010 = vshrl.u32 %v2009, 7
    %v2011 = vsub.s32 0, %v2010
    %v2012 = vrot.slane %v2008, %v2011
    %2013 = vmatprep.subr.mxu0 0.0
    %2014 = vmatpush1.msra.mxu0 %v1992
    %2015 = vmatprep.subr.mxu0 0.0
    %2016 = vmatpush1.msra.mxu0 %v1993
    %2017 = vmatprep.subr.mxu0 0.0
    %2018 = vmatpush1.msra.mxu0 %v1994
    %2019 = vmatprep.subr.mxu0 0.0
    %2020 = vmatpush1.msra.mxu0 %v1995
    %2021 = vmatprep.subr.mxu0 0.0
    %2022 = vmatpush1.msra.mxu0 %v1996
    %2023 = vmatprep.subr.mxu0 0.0
    %2024 = vmatpush1.msra.mxu0 %v1997
    %2025 = vmatprep.subr.mxu0 0.0
    %2026 = vmatpush1.msra.mxu0 %v1998
    %2027 = vmatprep.subr.mxu0 0.0
    %2028 = vmatpush1.msra.mxu0 %v1999
    %2029 = vmatprep.subr.mxu0 0.0
    %2030 = vmatpush1.msra.mxu0 %v2000
    %2031 = vmatprep.subr.mxu0 0.0
    %2032 = vmatpush1.msra.mxu0 %v2001
    %2033 = vmatprep.subr.mxu0 0.0
    %2034 = vmatpush1.msra.mxu0 %v2002
    %2035 = vmatprep.subr.mxu0 0.0
    %2036 = vmatpush1.msra.mxu0 %v2003
    %2037 = vmatprep.subr.mxu0 0.0
    %2038 = vmatpush1.msra.mxu0 %v2004
    %2039 = vmatprep.subr.mxu0 0.0
    %2040 = vmatpush1.msra.mxu0 %v2005
    %2041 = vmatprep.subr.mxu0 0.0
    %2042 = vmatpush1.msra.mxu0 %v2006
    %2043 = vmatprep.subr.mxu0 0.0
    %2044 = vmatpush1.msra.mxu0 %v2007
    %2045 = vmatprep.subr.mxu0 0.0
    %2046 = vmatpush1.msra.mxu0 0.0
    %2047 = vmatprep.subr.mxu0 0.0
    %2048 = vmatpush1.msra.mxu0 0.0
    %2049 = vmatprep.subr.mxu0 0.0
    %2050 = vmatpush1.msra.mxu0 0.0
    %2051 = vmatprep.subr.mxu0 0.0
    %2052 = vmatpush1.msra.mxu0 0.0
    %2053 = vmatprep.subr.mxu0 0.0
    %2054 = vmatpush1.msra.mxu0 0.0
    %2055 = vmatprep.subr.mxu0 0.0
    %2056 = vmatpush1.msra.mxu0 0.0
    %2057 = vmatprep.subr.mxu0 0.0
    %2058 = vmatpush1.msra.mxu0 0.0
    %2059 = vmatprep.subr.mxu0 0.0
    %2060 = vmatpush1.msra.mxu0 0.0
    %2061 = vmatprep.subr.mxu0 0.0
    %2062 = vmatpush1.msra.mxu0 0.0
    %2063 = vmatprep.subr.mxu0 0.0
    %2064 = vmatpush1.msra.mxu0 0.0
    %2065 = vmatprep.subr.mxu0 0.0
    %2066 = vmatpush1.msra.mxu0 0.0
    %2067 = vmatprep.subr.mxu0 0.0
    %2068 = vmatpush1.msra.mxu0 0.0
    %2069 = vmatprep.subr.mxu0 0.0
    %2070 = vmatpush1.msra.mxu0 0.0
    %2071 = vmatprep.subr.mxu0 0.0
    %2072 = vmatpush1.msra.mxu0 0.0
    %2073 = vmatprep.subr.mxu0 0.0
    %2074 = vmatpush1.msra.mxu0 0.0
    %2075 = vmatprep.subr.mxu0 0.0
    %2076 = vmatpush1.msra.mxu0 0.0
    %2077 = vmatprep.mubr.f32.mxu0 0.0
    %2078 = vmatmul.mubr.f32.gmra.mrb[0].mxu0 %v1988
    %v2079 = vpop.f32.mrb[0].mxu0
    %v2080 = vadd.f32 %v2012, %v2079
    %v2081 = vpop.f32.mrb[0].mxu0
    %2082 = vmatprep.mubr.f32.mxu0 0.0
    %2083 = vmatmul.mubr.f32.gmra.mrb[0].mxu0 %v1989
    %v2084 = vpop.f32.mrb[0].mxu0
    %v2085 = vadd.f32 %v2012, %v2084
    %v2086 = vpop.f32.mrb[0].mxu0
    %2087 = vmatprep.mubr.f32.mxu0 0.0
    %2088 = vmatmul.mubr.f32.gmra.mrb[0].mxu0 %v1990
    %v2089 = vpop.f32.mrb[0].mxu0
    %v2090 = vadd.f32 %v2012, %v2089
    %v2091 = vpop.f32.mrb[0].mxu0
    %2092 = vmatprep.mubr.f32.mxu0 0.0
    %2093 = vmatmul.mubr.f32.gmra.mrb[0].mxu0 %v1991
    %v2094 = vpop.f32.mrb[0].mxu0
    %v2095 = vadd.f32 %v2012, %v2094
    %v2096 = vpop.f32.mrb[0].mxu0
    %2097 = vdwg.mxu0
    %v2098 = vmax.f32 %v2080, 0.0
    %v2099 = vmax.f32 %v2085, 0.0
    %v2100 = vmax.f32 %v2090, 0.0
    %v2101 = vmax.f32 %v2095, 0.0
    %v2102 = vld [vmem:[%s5 + $0x80] sm:$0xff]
    %v2103 = vld [vmem:[%s5 + $0x88] sm:$0xff]
    %v2104 = vld [vmem:[%s5 + $0x90] sm:$0xff]
    %v2105 = vld [vmem:[%s5 + $0x98] sm:$0xff]
    %v2106 = vmul.f32 %v2098, %v2102
    %v2107 = vmul.f32 %v2099, %v2103
    %v2108 = vmul.f32 %v2100, %v2104
    %v2109 = vmul.f32 %v2101, %v2105
    %v2110 = vsel %vm1379, %v2106, -inf
    %v2111 = vsel %vm1379, %v2107, -inf
    %v2112 = vmax.f32 %v2110, %v2111
    %v2113 = vrot.slane %v2112, 4
    %v2114 = vmax.f32 %v2112, %v2113
    %v2115 = vrot.slane %v2114, 2
    %v2116 = vmax.f32 %v2114, %v2115
    %v2117 = vrot.slane %v2116, 1
    %v2118 = vmax.f32 %v2116, %v2117
    %v2119 = vsel %vm1379, %v2108, -inf
    %v2120 = vsel %vm1379, %v2109, -inf
    %v2121 = vmax.f32 %v2119, %v2120
    %v2122 = vrot.slane %v2121, 4
    %v2123 = vmax.f32 %v2121, %v2122
    %v2124 = vrot.slane %v2123, 2
    %v2125 = vmax.f32 %v2123, %v2124
    %v2126 = vrot.slane %v2125, 1
    %v2127 = vmax.f32 %v2125, %v2126
    %vm2128 = vcmask 1040384
    %v2129 = vsel %vm2128, %v2118, %v2127
    %v2130 = vld [vmem:[%s6] sm:$0xff]
    %v2131 = vld [vmem:[%s6 + $0x8] sm:$0xff]
    %v2132 = vld [vmem:[%s6 + $0x10] sm:$0xff]
    %v2133 = vld [vmem:[%s2 + $0xb] sm:$0x1]
    %v2134 = vlaneseq
    %v2135 = vshrl.u32 %v2134, 7
    %v2136 = vsub.s32 0, %v2135
    %v2137 = vrot.slane %v2133, %v2136
    %v2139 = vsel %vm1379, %v2129, 0
    %2141 = vmatprep.subr.mxu0 0.0
    %2142 = vmatpush1.msra.mxu0 %v2130
    %2143 = vmatprep.subr.mxu0 0.0
    %2144 = vmatpush1.msra.mxu0 %v2131
    %2145 = vmatprep.subr.mxu0 0.0
    %2146 = vmatpush1.msra.mxu0 %v2132
    %2147 = vmatprep.subr.mxu0 0.0
    %2148 = vmatpush1.msra.mxu0 0.0
    %2149 = vmatprep.subr.mxu0 0.0
    %2150 = vmatpush1.msra.mxu0 0.0
    %2151 = vmatprep.subr.mxu0 0.0
    %2152 = vmatpush1.msra.mxu0 0.0
    %2153 = vmatprep.subr.mxu0 0.0
    %2154 = vmatpush1.msra.mxu0 0.0
    %2155 = vmatprep.subr.mxu0 0.0
    %2156 = vmatpush1.msra.mxu0 0.0
    %2157 = vmatprep.subr.mxu0 0.0
    %2158 = vmatpush1.msra.mxu0 0.0
    %2159 = vmatprep.subr.mxu0 0.0
    %2160 = vmatpush1.msra.mxu0 0.0
    %2161 = vmatprep.subr.mxu0 0.0
    %2162 = vmatpush1.msra.mxu0 0.0
    %2163 = vmatprep.subr.mxu0 0.0
    %2164 = vmatpush1.msra.mxu0 0.0
    %2165 = vmatprep.subr.mxu0 0.0
    %2166 = vmatpush1.msra.mxu0 0.0
    %2167 = vmatprep.subr.mxu0 0.0
    %2168 = vmatpush1.msra.mxu0 0.0
    %2169 = vmatprep.subr.mxu0 0.0
    %2170 = vmatpush1.msra.mxu0 0.0
    %2171 = vmatprep.subr.mxu0 0.0
    %2172 = vmatpush1.msra.mxu0 0.0
    %2173 = vmatprep.subr.mxu0 0.0
    %2174 = vmatpush1.msra.mxu0 0.0
    %2175 = vmatprep.subr.mxu0 0.0
    %2176 = vmatpush1.msra.mxu0 0.0
    %2177 = vmatprep.subr.mxu0 0.0
    %2178 = vmatpush1.msra.mxu0 0.0
    %2179 = vmatprep.subr.mxu0 0.0
    %2180 = vmatpush1.msra.mxu0 0.0
    %2181 = vmatprep.subr.mxu0 0.0
    %2182 = vmatpush1.msra.mxu0 0.0
    %2183 = vmatprep.subr.mxu0 0.0
    %2184 = vmatpush1.msra.mxu0 0.0
    %2185 = vmatprep.subr.mxu0 0.0
    %2186 = vmatpush1.msra.mxu0 0.0
    %2187 = vmatprep.subr.mxu0 0.0
    %2188 = vmatpush1.msra.mxu0 0.0
    %2189 = vmatprep.subr.mxu0 0.0
    %2190 = vmatpush1.msra.mxu0 0.0
    %2191 = vmatprep.subr.mxu0 0.0
    %2192 = vmatpush1.msra.mxu0 0.0
    %2193 = vmatprep.subr.mxu0 0.0
    %2194 = vmatpush1.msra.mxu0 0.0
    %2195 = vmatprep.subr.mxu0 0.0
    %2196 = vmatpush1.msra.mxu0 0.0
    %2197 = vmatprep.subr.mxu0 0.0
    %2198 = vmatpush1.msra.mxu0 0.0
    %2199 = vmatprep.subr.mxu0 0.0
    %2200 = vmatpush1.msra.mxu0 0.0
    %2201 = vmatprep.subr.mxu0 0.0
    %2202 = vmatpush1.msra.mxu0 0.0
    %2203 = vmatprep.subr.mxu0 0.0
    %2204 = vmatpush1.msra.mxu0 0.0
    %2205 = vmatprep.mubr.f32.mxu0 0.0
    %2206 = vmatmul.mubr.f32.gmra.mrb[0].mxu0 %v2139
    %v2207 = vpop.f32.mrb[0].mxu0
    %v2208 = vadd.f32 %v2137, %v2207
    %v2209 = vpop.f32.mrb[0].mxu0
    %2210 = vdwg.mxu0
    %2211 = vst [vmem:[#allocation2] sm:$0x3] %v2208
    // Predicated region
    $region30: #{bert_cnn_forward.1} parent=1 // pred_check
      _
    $region31: #{bert_cnn_forward.1} parent=1 // pred_check_branch
      %2213 = sbr.rel (0) target = $region33
    $region32: #{bert_cnn_forward.1} parent=1 // pred_region
      %s2215 = ssub.s32 32, 32
      %2216 = vsyncadd [#allocation3], %s2215
      %s2218 = sshll.u32 [#allocation2], 4
      %s2219 = int_to_ptr.vmem [resolvable:$true] %s2218
      %2221 = dma.vmem_to_hbm [thread:$0]  %s2219, 32, %s7, [#allocation3]
    $region33: #{bert_cnn_forward.1} parent=1 // pred_fallthru
      _
    // Predicated region
    $region34: #{bert_cnn_forward.1} parent=1 // pred_check
      _
    $region35: #{bert_cnn_forward.1} parent=1 // pred_check_branch
      %2223 = sbr.rel (0) target = $region37
    $region36: #{bert_cnn_forward.1} parent=1 // pred_region
      %2224 = dma.done [#allocation3], 32
    $region37: #{bert_cnn_forward.1} parent=1 // pred_fallthru
      _
    %2225 = vsyncpa [#allocation3], 1

</llo_original>
